<compile_context>
chip_gen: v7x
topology: tpu7x:2x2x1
jax: 0.10.0
libtpu: 0.0.40
codegen_flags: <defaults>
</compile_context>

<pallas_src>
import jax
import jax.numpy as jnp
from jax import lax
from jax.experimental import pallas as pl
from jax.experimental.pallas import tpu as pltpu

BN_EPS = 1e-5


def _strips(H, WP, C, budget_bytes=4 * 2**20):
    """Row strips for the strip-mined im2col: list of (row_start, rows)."""
    rows = max(1, min(H, budget_bytes // (9 * C * WP * 2)))
    return [(r0, min(rows, H - r0)) for r0 in range(0, H, rows)]


def _vmem_limit_bytes(need_bytes):
    """Generation-aware scoped-VMEM limit with headroom for compiler scratch."""
    try:
        cap = int(pltpu.get_tpu_info().vmem_capacity_bytes)
    except Exception:
        cap = 64 * 2**20                       # conservative (v7x per-TC) fallback
    want = max(32 * 2**20, int(1.5 * need_bytes) + (4 << 20))
    return int(min(want, int(0.85 * cap)))


def _make_kernels(C, H, W, WP, strips):
    """Build pass-1 (stats) and pass-2 (apply) kernels as closures over static shapes."""

    def conv_prelu_strip(x_ref, w_ref, b_ref, alpha, patch_ref, r0, rows):
        """3x3 conv over the padded width (fused K=9C bf16 MXU matmul via lane-slice
        im2col) + bias + PReLU for `rows` output rows starting at output row r0.
        Returns (C, rows*WP) f32."""
        Ms = rows * WP
        base = r0 * WP
        # Stage the im2col patch: tap (ki,kj) is a contiguous lane slice of the
        # flattened padded image (no reshapes); taps stack on the sublane axis so every
        # staging store is full-lane-width.
        for ki in range(3):
            for kj in range(3):
                t = ki * 3 + kj
                start = base + ki * WP + kj
                patch_ref[t * C:(t + 1) * C, :Ms] = x_ref[0, :, start:start + Ms]
        y = jnp.dot(w_ref[...], patch_ref[:, :Ms],
                    preferred_element_type=jnp.float32)            # (C, Ms) f32
        y = y + b_ref[...]                                         # (C,1) lane-broadcast
        return jnp.where(y > 0, y, alpha * y)                      # shared-alpha PReLU

    def stats_kernel(alpha_ref, x_ref, w_ref, b_ref, mask_ref,
                     sum_ref, m2_ref, patch_ref):
        """Pass 1: per-strip per-channel sum and M2 (around per-strip mean)."""
        alpha = alpha_ref[0]
        for si, (r0, rows) in enumerate(strips):
            Ms = rows * WP
            inv_n = 1.0 / float(rows * W)
            y = conv_prelu_strip(x_ref, w_ref, b_ref, alpha, patch_ref, r0, rows)
            m = mask_ref[:, r0 * WP:r0 * WP + Ms]                  # (1, Ms) valid-column mask
            s = jnp.sum(y * m, axis=1, keepdims=True)              # (C, 1)
            d = (y - s * inv_n) * m
            m2 = jnp.sum(d * d, axis=1, keepdims=True)             # (C, 1)
            sum_ref[0, :, si:si + 1] = s
            m2_ref[0, :, si:si + 1] = m2

    def apply_kernel(alpha_ref, x_ref, w_ref, b_ref, scale_ref, shift_ref,
                     out_ref, patch_ref):
        """Pass 2: recompute conv+PReLU (bf16 matmul), apply folded BN affine, store
        lane-dense in the padded-width flat domain (residual + column drop in wrapper)."""
        alpha = alpha_ref[0]
        for (r0, rows) in strips:
            Ms = rows * WP
            y = conv_prelu_strip(x_ref, w_ref, b_ref, alpha, patch_ref, r0, rows)
            y = y * scale_ref[...] + shift_ref[...]                # folded BatchNorm
            out_ref[0, :, r0 * WP:r0 * WP + Ms] = y

    return stats_kernel, apply_kernel


def residual_block_forward(x_nchw, weight, bias, alpha, gamma, beta):
    """x_nchw: (N, C, H, W) f32; weight: (C, C, 3, 3) OIHW. Returns (N, C, H, W) f32."""
    N, C, H, W = x_nchw.shape
    HP, WP = H + 2, W + 2
    Mp = H * WP                      # flattened output extent incl. padded columns
    L = HP * WP + 2                  # flattened padded input + 1-element guard each end
    f32, bf16 = jnp.float32, jnp.bfloat16

    strips = _strips(H, WP, C)
    S = len(strips)
    max_rows = max(r for _, r in strips)

    # Padded + flattened bf16 input. cast + pad + reshape + guard-pad fuse into a single
    # XLA pass (read f32 x, write bf16 x_flat) -- no separate transpose passes anymore.
    x_pad = jnp.pad(x_nchw.astype(bf16), ((0, 0), (0, 0), (1, 1), (1, 1)))
    x_flat = jnp.pad(x_pad.reshape(N, C, HP * WP), ((0, 0), (0, 0), (1, 1)))

    # OIHW -> (C_out, 9*C_in), columns tap-major (ki*3+kj) then c_in, bf16 for the MXU.
    w_fused = jnp.transpose(weight, (0, 2, 3, 1)).reshape(C, 9 * C).astype(bf16)
    b_col = bias.reshape(C, 1).astype(f32)
    alpha1 = jnp.asarray(alpha, f32).reshape(1)

    # Valid-column mask over the padded-width output domain (1 for real pixels).
    col = jnp.arange(Mp, dtype=jnp.int32) % WP
    mask = ((col >= 1) & (col <= W)).astype(f32).reshape(1, Mp)

    # ---- VMEM budget (generation-aware) ----
    in_block = C * L * 2
    out_block = C * Mp * 4
    patch_bytes = 9 * C * max_rows * WP * 2
    live_f32 = 6 * C * max_rows * WP * 4
    need = (2 * in_block + 2 * out_block + patch_bytes + live_f32
            + 2 * (C * 9 * C * 2) + Mp * 8)
    cparams = pltpu.CompilerParams(
        dimension_semantics=("parallel",),
        vmem_limit_bytes=_vmem_limit_bytes(need))

    stats_kernel, apply_kernel = _make_kernels(C, H, W, WP, strips)

    x_spec = pl.BlockSpec((1, C, L), lambda n: (n, 0, 0))
    w_spec = pl.BlockSpec((C, 9 * C), lambda n: (0, 0))
    col_spec = pl.BlockSpec((C, 1), lambda n: (0, 0))
    mask_spec = pl.BlockSpec((1, Mp), lambda n: (0, 0))
    alpha_spec = pl.BlockSpec(memory_space=pltpu.MemorySpace.SMEM)
    stats_spec = pl.BlockSpec((1, C, S), lambda n: (n, 0, 0))
    scratch = [pltpu.VMEM((9 * C, max_rows * WP), bf16)]

    conv_flops = 2 * N * Mp * 9 * C * C

    # ---------------- pass 1: per-strip channel sum / M2 ----------------
    psum, pm2 = pl.pallas_call(
        stats_kernel,
        grid_spec=pltpu.PrefetchScalarGridSpec(
            num_scalar_prefetch=0, grid=(N,),
            in_specs=[alpha_spec, x_spec, w_spec, col_spec, mask_spec],
            out_specs=(stats_spec, stats_spec),
            scratch_shapes=scratch),
        out_shape=(jax.ShapeDtypeStruct((N, C, S), f32),
                   jax.ShapeDtypeStruct((N, C, S), f32)),
        compiler_params=cparams,
        cost_estimate=pl.CostEstimate(flops=conv_flops, transcendentals=0,
                                      bytes_accessed=N * in_block + 2 * N * C * S * 4),
    )(alpha1, x_flat, w_fused, b_col, mask)

    # ---- combine per-strip stats (parallel/Chan formula; no E[y^2]-mean^2) ----
    n_s = jnp.asarray([float(r * W) for _, r in strips], f32)          # (S,)
    total_n = float(N * H * W)
    total_sum = jnp.sum(psum, axis=(0, 2))                             # (C,)
    mean = total_sum / total_n
    mean_s = psum / n_s[None, None, :]
    m2 = jnp.sum(pm2, axis=(0, 2)) + jnp.sum(
        n_s[None, None, :] * (mean_s - mean[None, :, None]) ** 2, axis=(0, 2))
    var = jnp.maximum(m2 / total_n, 0.0)           # biased (training-mode) variance
    inv_std = lax.rsqrt(var + BN_EPS)
    g = gamma.astype(f32) * inv_std
    scale = g.reshape(C, 1)
    shift = (beta.astype(f32) - mean * g).reshape(C, 1)

    # ---------------- pass 2: conv + PReLU + folded BN (lane-dense store) ----------------
    y_flat = pl.pallas_call(
        apply_kernel,
        grid_spec=pltpu.PrefetchScalarGridSpec(
            num_scalar_prefetch=0, grid=(N,),
            in_specs=[alpha_spec, x_spec, w_spec, col_spec, col_spec, col_spec],
            out_specs=pl.BlockSpec((1, C, Mp), lambda n: (n, 0, 0)),
            scratch_shapes=scratch),
        out_shape=jax.ShapeDtypeStruct((N, C, Mp), f32),
        compiler_params=cparams,
        cost_estimate=pl.CostEstimate(flops=conv_flops + 4 * N * Mp * C,
                                      transcendentals=0,
                                      bytes_accessed=N * (in_block + out_block)),
    )(alpha1, x_flat, w_fused, b_col, scale, shift)

    # Drop the two padded columns per row and add the exact-f32 residual; XLA fuses the
    # slice + add into a single pass over the output.
    y = y_flat.reshape(N, C, H, WP)[:, :, :, 1:1 + W]
    return x_nchw + y


def _reference_forward(x, weight, bias, alpha, gamma, beta, matmul_dtype=None):
    """Pure-JAX reference matching PyTorch ResidualBlock.forward (training-mode BN).
    matmul_dtype=bfloat16 reproduces the kernel's bf16 MXU operands (f32 accumulate)."""
    xc, wc = x, weight
    if matmul_dtype is not None:
        xc = x.astype(matmul_dtype).astype(jnp.float32)
        wc = weight.astype(matmul_dtype).astype(jnp.float32)
    y = lax.conv_general_dilated(
        xc, wc, window_strides=(1, 1), padding=((1, 1), (1, 1)),
        dimension_numbers=("NCHW", "OIHW", "NCHW"),
        precision=lax.Precision.HIGHEST,
        preferred_element_type=jnp.float32)
    y = y + bias.reshape(1, -1, 1, 1)
    y = jnp.where(y > 0, y, alpha * y)
    mean = jnp.mean(y, axis=(0, 2, 3), keepdims=True)
    var = jnp.mean((y - mean) ** 2, axis=(0, 2, 3), keepdims=True)
    y = (y - mean) * lax.rsqrt(var + BN_EPS) * gamma.reshape(1, -1, 1, 1) \
        + beta.reshape(1, -1, 1, 1)
    return x + y


if __name__ == "__main__":
    # Small shapes consistent with the module (channels -> C=4 for the demo).
    N, C, H, W = 2, 4, 16, 16

    key = jax.random.PRNGKey(0)
    kx, kw, kb = jax.random.split(key, 3)
    x = jax.random.normal(kx, (N, C, H, W), dtype=jnp.float32)

    # Deterministic parameters (shapes per nn.Conv2d / nn.PReLU / nn.BatchNorm2d).
    weight = 0.05 * jax.random.normal(kw, (C, C, 3, 3), dtype=jnp.float32)  # conv1.weight
    bias = 0.05 * jax.random.normal(kb, (C,), dtype=jnp.float32)            # conv1.bias
    alpha = jnp.float32(0.25)                                               # prelu default
    gamma = jnp.ones((C,), jnp.float32)                                     # bn2.weight
    beta = jnp.zeros((C,), jnp.float32)                                     # bn2.bias

    fwd = jax.jit(residual_block_forward)
    out = jax.block_until_ready(fwd(x, weight, bias, alpha, gamma, beta))
    assert out.shape == (N, C, H, W)

    # Strict check vs. a reference using the same bf16 matmul operands (f32 accumulate,
    # exact-f32 residual / BN / PReLU) -- validates the kernel math.
    ref_bf16 = _reference_forward(x, weight, bias, alpha, gamma, beta,
                                  matmul_dtype=jnp.bfloat16)
    assert jnp.allclose(out, ref_bf16, atol=1e-4, rtol=1e-4), \
        "kernel mismatch vs bf16-consistent reference"

    # Loose sanity check vs. the full-f32 PyTorch-semantics reference (bounds the bf16
    # matmul-operand quantization effect only).
    ref_f32 = _reference_forward(x, weight, bias, alpha, gamma, beta)
    assert jnp.allclose(out, ref_f32, atol=0.25, rtol=0.05), \
        "kernel deviates too far from f32 reference"

    print("KERNEL_OK")
</pallas_src>

<mosaic_0001>
module attributes {stable_mosaic.version = 11 : i64} {
  func.func @stats_kernel(%arg0: i32, %arg1: memref<1xf32, #tpu.memory_space<smem>>, %arg2: memref<1x4x326xbf16, #tpu.memory_space<vmem>>, %arg3: memref<4x36xbf16, #tpu.memory_space<vmem>>, %arg4: memref<4x1xf32, #tpu.memory_space<vmem>>, %arg5: memref<1x288xf32, #tpu.memory_space<vmem>>, %arg6: memref<1x4x1xf32, #tpu.memory_space<vmem>>, %arg7: memref<1x4x1xf32, #tpu.memory_space<vmem>>, %arg8: memref<36x288xbf16, #tpu.memory_space<vmem>>) attributes {dimension_semantics = [#tpu.dimension_semantics<parallel>], iteration_bounds = array<i64: 2>, scalar_prefetch = 0 : i64, scratch_operands = 1 : i64, tpu.core_type = #tpu.core_type<tc>, window_params = [{transform_indices = @transform_0, window_bounds = array<i64: 1>}, {transform_indices = @transform_1, window_bounds = array<i64: 1, 4, 326>}, {pipeline_mode = #tpu.pipeline_mode<synchronous>, transform_indices = @transform_2, window_bounds = array<i64: 4, 36>}, {pipeline_mode = #tpu.pipeline_mode<synchronous>, transform_indices = @transform_3, window_bounds = array<i64: 4, 1>}, {pipeline_mode = #tpu.pipeline_mode<synchronous>, transform_indices = @transform_4, window_bounds = array<i64: 1, 288>}, {transform_indices = @transform_5, window_bounds = array<i64: 1, 4, 1>}, {transform_indices = @transform_6, window_bounds = array<i64: 1, 4, 1>}]} {
    %c0 = arith.constant 0 : index
    %0 = memref.load %arg1[%c0] : memref<1xf32, #tpu.memory_space<smem>>
    %c0_0 = arith.constant 0 : index
    %c0_1 = arith.constant 0 : index
    %c0_2 = arith.constant 0 : index
    %1 = vector.load %arg2[%c0_0, %c0_1, %c0_2] : memref<1x4x326xbf16, #tpu.memory_space<vmem>>, vector<1x4x288xbf16>
    %2 = vector.shape_cast %1 : vector<1x4x288xbf16> to vector<4x288xbf16>
    %c0_3 = arith.constant 0 : index
    %c0_4 = arith.constant 0 : index
    %3 = vector.load %arg8[%c0_3, %c0_4] : memref<36x288xbf16, #tpu.memory_space<vmem>>, vector<4x288xbf16>
    tpu.vector_store %arg8[%c0_3, %c0_4], %2 {strides = array<i32>} : memref<36x288xbf16, #tpu.memory_space<vmem>>, vector<4x288xbf16>,
    %c0_5 = arith.constant 0 : index
    %c0_6 = arith.constant 0 : index
    %c1 = arith.constant 1 : index
    %4 = vector.load %arg2[%c0_5, %c0_6, %c1] : memref<1x4x326xbf16, #tpu.memory_space<vmem>>, vector<1x4x288xbf16>
    %5 = vector.shape_cast %4 : vector<1x4x288xbf16> to vector<4x288xbf16>
    %c4 = arith.constant 4 : index
    %c0_7 = arith.constant 0 : index
    %6 = vector.load %arg8[%c4, %c0_7] : memref<36x288xbf16, #tpu.memory_space<vmem>>, vector<4x288xbf16>
    tpu.vector_store %arg8[%c4, %c0_7], %5 {strides = array<i32>} : memref<36x288xbf16, #tpu.memory_space<vmem>>, vector<4x288xbf16>,
    %c0_8 = arith.constant 0 : index
    %c0_9 = arith.constant 0 : index
    %c2 = arith.constant 2 : index
    %7 = vector.load %arg2[%c0_8, %c0_9, %c2] : memref<1x4x326xbf16, #tpu.memory_space<vmem>>, vector<1x4x288xbf16>
    %8 = vector.shape_cast %7 : vector<1x4x288xbf16> to vector<4x288xbf16>
    %c8 = arith.constant 8 : index
    %c0_10 = arith.constant 0 : index
    %9 = vector.load %arg8[%c8, %c0_10] : memref<36x288xbf16, #tpu.memory_space<vmem>>, vector<4x288xbf16>
    tpu.vector_store %arg8[%c8, %c0_10], %8 {strides = array<i32>} : memref<36x288xbf16, #tpu.memory_space<vmem>>, vector<4x288xbf16>,
    %c0_11 = arith.constant 0 : index
    %c0_12 = arith.constant 0 : index
    %c18 = arith.constant 18 : index
    %10 = vector.load %arg2[%c0_11, %c0_12, %c18] : memref<1x4x326xbf16, #tpu.memory_space<vmem>>, vector<1x4x288xbf16>
    %11 = vector.shape_cast %10 : vector<1x4x288xbf16> to vector<4x288xbf16>
    %c12 = arith.constant 12 : index
    %c0_13 = arith.constant 0 : index
    %12 = vector.load %arg8[%c12, %c0_13] : memref<36x288xbf16, #tpu.memory_space<vmem>>, vector<4x288xbf16>
    tpu.vector_store %arg8[%c12, %c0_13], %11 {strides = array<i32>} : memref<36x288xbf16, #tpu.memory_space<vmem>>, vector<4x288xbf16>,
    %c0_14 = arith.constant 0 : index
    %c0_15 = arith.constant 0 : index
    %c19 = arith.constant 19 : index
    %13 = vector.load %arg2[%c0_14, %c0_15, %c19] : memref<1x4x326xbf16, #tpu.memory_space<vmem>>, vector<1x4x288xbf16>
    %14 = vector.shape_cast %13 : vector<1x4x288xbf16> to vector<4x288xbf16>
    %c16 = arith.constant 16 : index
    %c0_16 = arith.constant 0 : index
    %15 = vector.load %arg8[%c16, %c0_16] : memref<36x288xbf16, #tpu.memory_space<vmem>>, vector<4x288xbf16>
    tpu.vector_store %arg8[%c16, %c0_16], %14 {strides = array<i32>} : memref<36x288xbf16, #tpu.memory_space<vmem>>, vector<4x288xbf16>,
    %c0_17 = arith.constant 0 : index
    %c0_18 = arith.constant 0 : index
    %c20 = arith.constant 20 : index
    %16 = vector.load %arg2[%c0_17, %c0_18, %c20] : memref<1x4x326xbf16, #tpu.memory_space<vmem>>, vector<1x4x288xbf16>
    %17 = vector.shape_cast %16 : vector<1x4x288xbf16> to vector<4x288xbf16>
    %c20_19 = arith.constant 20 : index
    %c0_20 = arith.constant 0 : index
    %18 = vector.load %arg8[%c20_19, %c0_20] : memref<36x288xbf16, #tpu.memory_space<vmem>>, vector<4x288xbf16>
    tpu.vector_store %arg8[%c20_19, %c0_20], %17 {strides = array<i32>} : memref<36x288xbf16, #tpu.memory_space<vmem>>, vector<4x288xbf16>,
    %c0_21 = arith.constant 0 : index
    %c0_22 = arith.constant 0 : index
    %c36 = arith.constant 36 : index
    %19 = vector.load %arg2[%c0_21, %c0_22, %c36] : memref<1x4x326xbf16, #tpu.memory_space<vmem>>, vector<1x4x288xbf16>
    %20 = vector.shape_cast %19 : vector<1x4x288xbf16> to vector<4x288xbf16>
    %c24 = arith.constant 24 : index
    %c0_23 = arith.constant 0 : index
    %21 = vector.load %arg8[%c24, %c0_23] : memref<36x288xbf16, #tpu.memory_space<vmem>>, vector<4x288xbf16>
    tpu.vector_store %arg8[%c24, %c0_23], %20 {strides = array<i32>} : memref<36x288xbf16, #tpu.memory_space<vmem>>, vector<4x288xbf16>,
    %c0_24 = arith.constant 0 : index
    %c0_25 = arith.constant 0 : index
    %c37 = arith.constant 37 : index
    %22 = vector.load %arg2[%c0_24, %c0_25, %c37] : memref<1x4x326xbf16, #tpu.memory_space<vmem>>, vector<1x4x288xbf16>
    %23 = vector.shape_cast %22 : vector<1x4x288xbf16> to vector<4x288xbf16>
    %c28 = arith.constant 28 : index
    %c0_26 = arith.constant 0 : index
    %24 = vector.load %arg8[%c28, %c0_26] : memref<36x288xbf16, #tpu.memory_space<vmem>>, vector<4x288xbf16>
    tpu.vector_store %arg8[%c28, %c0_26], %23 {strides = array<i32>} : memref<36x288xbf16, #tpu.memory_space<vmem>>, vector<4x288xbf16>,
    %c0_27 = arith.constant 0 : index
    %c0_28 = arith.constant 0 : index
    %c38 = arith.constant 38 : index
    %25 = vector.load %arg2[%c0_27, %c0_28, %c38] : memref<1x4x326xbf16, #tpu.memory_space<vmem>>, vector<1x4x288xbf16>
    %26 = vector.shape_cast %25 : vector<1x4x288xbf16> to vector<4x288xbf16>
    %c32 = arith.constant 32 : index
    %c0_29 = arith.constant 0 : index
    %27 = vector.load %arg8[%c32, %c0_29] : memref<36x288xbf16, #tpu.memory_space<vmem>>, vector<4x288xbf16>
    tpu.vector_store %arg8[%c32, %c0_29], %26 {strides = array<i32>} : memref<36x288xbf16, #tpu.memory_space<vmem>>, vector<4x288xbf16>,
    %c0_30 = arith.constant 0 : index
    %c0_31 = arith.constant 0 : index
    %28 = vector.load %arg3[%c0_30, %c0_31] : memref<4x36xbf16, #tpu.memory_space<vmem>>, vector<4x36xbf16>
    %c0_32 = arith.constant 0 : index
    %c0_33 = arith.constant 0 : index
    %29 = vector.load %arg8[%c0_32, %c0_33] : memref<36x288xbf16, #tpu.memory_space<vmem>>, vector<36x288xbf16>
    %cst = arith.constant dense<0.000000e+00> : vector<4x288xf32>
    %30 = tpu.matmul %28, %29, %cst {dimension_numbers = #tpu.dot_dimension_numbers<[1], [0], [0], [1], [0, 0, 1, 1], [], []>} : vector<4x36xbf16>, vector<36x288xbf16>, vector<4x288xf32> -> vector<4x288xf32>
    %c0_34 = arith.constant 0 : index
    %c0_35 = arith.constant 0 : index
    %31 = vector.load %arg4[%c0_34, %c0_35] : memref<4x1xf32, #tpu.memory_space<vmem>>, vector<4x1xf32>
    %32 = vector.broadcast %31 : vector<4x1xf32> to vector<4x288xf32>
    %33 = arith.addf %30, %32 : vector<4x288xf32>
    %cst_36 = arith.constant 0.000000e+00 : f32
    %34 = vector.broadcast %cst_36 : f32 to vector<4x288xf32>
    %35 = arith.cmpf ogt, %33, %34 : vector<4x288xf32>
    %36 = vector.broadcast %0 : f32 to vector<4x288xf32>
    %37 = arith.mulf %36, %33 : vector<4x288xf32>
    %38 = arith.select %35, %33, %37 : vector<4x288xi1>, vector<4x288xf32>
    %c0_37 = arith.constant 0 : index
    %c0_38 = arith.constant 0 : index
    %39 = vector.load %arg5[%c0_37, %c0_38] : memref<1x288xf32, #tpu.memory_space<vmem>>, vector<1x288xf32>
    %40 = vector.broadcast %39 : vector<1x288xf32> to vector<4x288xf32>
    %41 = arith.mulf %38, %40 : vector<4x288xf32>
    %cst_39 = arith.constant dense<0.000000e+00> : vector<4xf32>
    %42 = vector.multi_reduction <add>, %41, %cst_39 [1] : vector<4x288xf32> to vector<4xf32>
    %43 = vector.shape_cast %42 : vector<4xf32> to vector<4x1xf32>
    %cst_40 = arith.constant 3.906250e-03 : f32
    %44 = vector.broadcast %cst_40 : f32 to vector<4x1xf32>
    %45 = arith.mulf %43, %44 : vector<4x1xf32>
    %46 = vector.broadcast %45 : vector<4x1xf32> to vector<4x288xf32>
    %47 = arith.subf %38, %46 : vector<4x288xf32>
    %48 = vector.broadcast %39 : vector<1x288xf32> to vector<4x288xf32>
    %49 = arith.mulf %47, %48 : vector<4x288xf32>
    %50 = arith.mulf %49, %49 : vector<4x288xf32>
    %cst_41 = arith.constant dense<0.000000e+00> : vector<4xf32>
    %51 = vector.multi_reduction <add>, %50, %cst_41 [1] : vector<4x288xf32> to vector<4xf32>
    %52 = vector.shape_cast %51 : vector<4xf32> to vector<4x1xf32>
    %c0_42 = arith.constant 0 : index
    %c0_43 = arith.constant 0 : index
    %c0_44 = arith.constant 0 : index
    %53 = vector.load %arg6[%c0_42, %c0_43, %c0_44] : memref<1x4x1xf32, #tpu.memory_space<vmem>>, vector<1x4x1xf32>
    %54 = vector.shape_cast %53 : vector<1x4x1xf32> to vector<4x1xf32>
    %55 = vector.shape_cast %43 : vector<4x1xf32> to vector<1x4x1xf32>
    tpu.vector_store %arg6[%c0_42, %c0_43, %c0_44], %55 {strides = array<i32>} : memref<1x4x1xf32, #tpu.memory_space<vmem>>, vector<1x4x1xf32>,
    %c0_45 = arith.constant 0 : index
    %c0_46 = arith.constant 0 : index
    %c0_47 = arith.constant 0 : index
    %56 = vector.load %arg7[%c0_45, %c0_46, %c0_47] : memref<1x4x1xf32, #tpu.memory_space<vmem>>, vector<1x4x1xf32>
    %57 = vector.shape_cast %56 : vector<1x4x1xf32> to vector<4x1xf32>
    %58 = vector.shape_cast %52 : vector<4x1xf32> to vector<1x4x1xf32>
    tpu.vector_store %arg7[%c0_45, %c0_46, %c0_47], %58 {strides = array<i32>} : memref<1x4x1xf32, #tpu.memory_space<vmem>>, vector<1x4x1xf32>,
    return
  }
  func.func @transform_0(%arg0: i32) -> i32 {
    %c0_i32 = arith.constant 0 : i32
    %c0_i32_0 = arith.constant 0 : i32
    return %c0_i32 : i32
  }
  func.func @transform_1(%arg0: i32) -> (i32, i32, i32) {
    %c0_i32 = arith.constant 0 : i32
    %c0_i32_0 = arith.constant 0 : i32
    %c0_i32_1 = arith.constant 0 : i32
    return %arg0, %c0_i32, %c0_i32_0 : i32, i32, i32
  }
  func.func @transform_2(%arg0: i32) -> (i32, i32) {
    %c0_i32 = arith.constant 0 : i32
    %c0_i32_0 = arith.constant 0 : i32
    %c0_i32_1 = arith.constant 0 : i32
    return %c0_i32, %c0_i32_0 : i32, i32
  }
  func.func @transform_3(%arg0: i32) -> (i32, i32) {
    %c0_i32 = arith.constant 0 : i32
    %c0_i32_0 = arith.constant 0 : i32
    %c0_i32_1 = arith.constant 0 : i32
    return %c0_i32, %c0_i32_0 : i32, i32
  }
  func.func @transform_4(%arg0: i32) -> (i32, i32) {
    %c0_i32 = arith.constant 0 : i32
    %c0_i32_0 = arith.constant 0 : i32
    %c0_i32_1 = arith.constant 0 : i32
    return %c0_i32, %c0_i32_0 : i32, i32
  }
  func.func @transform_5(%arg0: i32) -> (i32, i32, i32) {
    %c0_i32 = arith.constant 0 : i32
    %c0_i32_0 = arith.constant 0 : i32
    %c0_i32_1 = arith.constant 0 : i32
    return %arg0, %c0_i32, %c0_i32_0 : i32, i32, i32
  }
  func.func @transform_6(%arg0: i32) -> (i32, i32, i32) {
    %c0_i32 = arith.constant 0 : i32
    %c0_i32_0 = arith.constant 0 : i32
    %c0_i32_1 = arith.constant 0 : i32
    return %arg0, %c0_i32, %c0_i32_0 : i32, i32, i32
  }
}

module attributes {stable_mosaic.version = 11 : i64} {
  func.func @apply_kernel(%arg0: i32, %arg1: memref<1xf32, #tpu.memory_space<smem>>, %arg2: memref<1x4x326xbf16, #tpu.memory_space<vmem>>, %arg3: memref<4x36xbf16, #tpu.memory_space<vmem>>, %arg4: memref<4x1xf32, #tpu.memory_space<vmem>>, %arg5: memref<4x1xf32, #tpu.memory_space<vmem>>, %arg6: memref<4x1xf32, #tpu.memory_space<vmem>>, %arg7: memref<1x4x288xf32, #tpu.memory_space<vmem>>, %arg8: memref<36x288xbf16, #tpu.memory_space<vmem>>) attributes {dimension_semantics = [#tpu.dimension_semantics<parallel>], iteration_bounds = array<i64: 2>, scalar_prefetch = 0 : i64, scratch_operands = 1 : i64, tpu.core_type = #tpu.core_type<tc>, window_params = [{transform_indices = @transform_0, window_bounds = array<i64: 1>}, {transform_indices = @transform_1, window_bounds = array<i64: 1, 4, 326>}, {pipeline_mode = #tpu.pipeline_mode<synchronous>, transform_indices = @transform_2, window_bounds = array<i64: 4, 36>}, {pipeline_mode = #tpu.pipeline_mode<synchronous>, transform_indices = @transform_3, window_bounds = array<i64: 4, 1>}, {pipeline_mode = #tpu.pipeline_mode<synchronous>, transform_indices = @transform_4, window_bounds = array<i64: 4, 1>}, {pipeline_mode = #tpu.pipeline_mode<synchronous>, transform_indices = @transform_5, window_bounds = array<i64: 4, 1>}, {transform_indices = @transform_6, window_bounds = array<i64: 1, 4, 288>}]} {
    %c0 = arith.constant 0 : index
    %0 = memref.load %arg1[%c0] : memref<1xf32, #tpu.memory_space<smem>>
    %c0_0 = arith.constant 0 : index
    %c0_1 = arith.constant 0 : index
    %c0_2 = arith.constant 0 : index
    %1 = vector.load %arg2[%c0_0, %c0_1, %c0_2] : memref<1x4x326xbf16, #tpu.memory_space<vmem>>, vector<1x4x288xbf16>
    %2 = vector.shape_cast %1 : vector<1x4x288xbf16> to vector<4x288xbf16>
    %c0_3 = arith.constant 0 : index
    %c0_4 = arith.constant 0 : index
    %3 = vector.load %arg8[%c0_3, %c0_4] : memref<36x288xbf16, #tpu.memory_space<vmem>>, vector<4x288xbf16>
    tpu.vector_store %arg8[%c0_3, %c0_4], %2 {strides = array<i32>} : memref<36x288xbf16, #tpu.memory_space<vmem>>, vector<4x288xbf16>,
    %c0_5 = arith.constant 0 : index
    %c0_6 = arith.constant 0 : index
    %c1 = arith.constant 1 : index
    %4 = vector.load %arg2[%c0_5, %c0_6, %c1] : memref<1x4x326xbf16, #tpu.memory_space<vmem>>, vector<1x4x288xbf16>
    %5 = vector.shape_cast %4 : vector<1x4x288xbf16> to vector<4x288xbf16>
    %c4 = arith.constant 4 : index
    %c0_7 = arith.constant 0 : index
    %6 = vector.load %arg8[%c4, %c0_7] : memref<36x288xbf16, #tpu.memory_space<vmem>>, vector<4x288xbf16>
    tpu.vector_store %arg8[%c4, %c0_7], %5 {strides = array<i32>} : memref<36x288xbf16, #tpu.memory_space<vmem>>, vector<4x288xbf16>,
    %c0_8 = arith.constant 0 : index
    %c0_9 = arith.constant 0 : index
    %c2 = arith.constant 2 : index
    %7 = vector.load %arg2[%c0_8, %c0_9, %c2] : memref<1x4x326xbf16, #tpu.memory_space<vmem>>, vector<1x4x288xbf16>
    %8 = vector.shape_cast %7 : vector<1x4x288xbf16> to vector<4x288xbf16>
    %c8 = arith.constant 8 : index
    %c0_10 = arith.constant 0 : index
    %9 = vector.load %arg8[%c8, %c0_10] : memref<36x288xbf16, #tpu.memory_space<vmem>>, vector<4x288xbf16>
    tpu.vector_store %arg8[%c8, %c0_10], %8 {strides = array<i32>} : memref<36x288xbf16, #tpu.memory_space<vmem>>, vector<4x288xbf16>,
    %c0_11 = arith.constant 0 : index
    %c0_12 = arith.constant 0 : index
    %c18 = arith.constant 18 : index
    %10 = vector.load %arg2[%c0_11, %c0_12, %c18] : memref<1x4x326xbf16, #tpu.memory_space<vmem>>, vector<1x4x288xbf16>
    %11 = vector.shape_cast %10 : vector<1x4x288xbf16> to vector<4x288xbf16>
    %c12 = arith.constant 12 : index
    %c0_13 = arith.constant 0 : index
    %12 = vector.load %arg8[%c12, %c0_13] : memref<36x288xbf16, #tpu.memory_space<vmem>>, vector<4x288xbf16>
    tpu.vector_store %arg8[%c12, %c0_13], %11 {strides = array<i32>} : memref<36x288xbf16, #tpu.memory_space<vmem>>, vector<4x288xbf16>,
    %c0_14 = arith.constant 0 : index
    %c0_15 = arith.constant 0 : index
    %c19 = arith.constant 19 : index
    %13 = vector.load %arg2[%c0_14, %c0_15, %c19] : memref<1x4x326xbf16, #tpu.memory_space<vmem>>, vector<1x4x288xbf16>
    %14 = vector.shape_cast %13 : vector<1x4x288xbf16> to vector<4x288xbf16>
    %c16 = arith.constant 16 : index
    %c0_16 = arith.constant 0 : index
    %15 = vector.load %arg8[%c16, %c0_16] : memref<36x288xbf16, #tpu.memory_space<vmem>>, vector<4x288xbf16>
    tpu.vector_store %arg8[%c16, %c0_16], %14 {strides = array<i32>} : memref<36x288xbf16, #tpu.memory_space<vmem>>, vector<4x288xbf16>,
    %c0_17 = arith.constant 0 : index
    %c0_18 = arith.constant 0 : index
    %c20 = arith.constant 20 : index
    %16 = vector.load %arg2[%c0_17, %c0_18, %c20] : memref<1x4x326xbf16, #tpu.memory_space<vmem>>, vector<1x4x288xbf16>
    %17 = vector.shape_cast %16 : vector<1x4x288xbf16> to vector<4x288xbf16>
    %c20_19 = arith.constant 20 : index
    %c0_20 = arith.constant 0 : index
    %18 = vector.load %arg8[%c20_19, %c0_20] : memref<36x288xbf16, #tpu.memory_space<vmem>>, vector<4x288xbf16>
    tpu.vector_store %arg8[%c20_19, %c0_20], %17 {strides = array<i32>} : memref<36x288xbf16, #tpu.memory_space<vmem>>, vector<4x288xbf16>,
    %c0_21 = arith.constant 0 : index
    %c0_22 = arith.constant 0 : index
    %c36 = arith.constant 36 : index
    %19 = vector.load %arg2[%c0_21, %c0_22, %c36] : memref<1x4x326xbf16, #tpu.memory_space<vmem>>, vector<1x4x288xbf16>
    %20 = vector.shape_cast %19 : vector<1x4x288xbf16> to vector<4x288xbf16>
    %c24 = arith.constant 24 : index
    %c0_23 = arith.constant 0 : index
    %21 = vector.load %arg8[%c24, %c0_23] : memref<36x288xbf16, #tpu.memory_space<vmem>>, vector<4x288xbf16>
    tpu.vector_store %arg8[%c24, %c0_23], %20 {strides = array<i32>} : memref<36x288xbf16, #tpu.memory_space<vmem>>, vector<4x288xbf16>,
    %c0_24 = arith.constant 0 : index
    %c0_25 = arith.constant 0 : index
    %c37 = arith.constant 37 : index
    %22 = vector.load %arg2[%c0_24, %c0_25, %c37] : memref<1x4x326xbf16, #tpu.memory_space<vmem>>, vector<1x4x288xbf16>
    %23 = vector.shape_cast %22 : vector<1x4x288xbf16> to vector<4x288xbf16>
    %c28 = arith.constant 28 : index
    %c0_26 = arith.constant 0 : index
    %24 = vector.load %arg8[%c28, %c0_26] : memref<36x288xbf16, #tpu.memory_space<vmem>>, vector<4x288xbf16>
    tpu.vector_store %arg8[%c28, %c0_26], %23 {strides = array<i32>} : memref<36x288xbf16, #tpu.memory_space<vmem>>, vector<4x288xbf16>,
    %c0_27 = arith.constant 0 : index
    %c0_28 = arith.constant 0 : index
    %c38 = arith.constant 38 : index
    %25 = vector.load %arg2[%c0_27, %c0_28, %c38] : memref<1x4x326xbf16, #tpu.memory_space<vmem>>, vector<1x4x288xbf16>
    %26 = vector.shape_cast %25 : vector<1x4x288xbf16> to vector<4x288xbf16>
    %c32 = arith.constant 32 : index
    %c0_29 = arith.constant 0 : index
    %27 = vector.load %arg8[%c32, %c0_29] : memref<36x288xbf16, #tpu.memory_space<vmem>>, vector<4x288xbf16>
    tpu.vector_store %arg8[%c32, %c0_29], %26 {strides = array<i32>} : memref<36x288xbf16, #tpu.memory_space<vmem>>, vector<4x288xbf16>,
    %c0_30 = arith.constant 0 : index
    %c0_31 = arith.constant 0 : index
    %28 = vector.load %arg3[%c0_30, %c0_31] : memref<4x36xbf16, #tpu.memory_space<vmem>>, vector<4x36xbf16>
    %c0_32 = arith.constant 0 : index
    %c0_33 = arith.constant 0 : index
    %29 = vector.load %arg8[%c0_32, %c0_33] : memref<36x288xbf16, #tpu.memory_space<vmem>>, vector<36x288xbf16>
    %cst = arith.constant dense<0.000000e+00> : vector<4x288xf32>
    %30 = tpu.matmul %28, %29, %cst {dimension_numbers = #tpu.dot_dimension_numbers<[1], [0], [0], [1], [0, 0, 1, 1], [], []>} : vector<4x36xbf16>, vector<36x288xbf16>, vector<4x288xf32> -> vector<4x288xf32>
    %c0_34 = arith.constant 0 : index
    %c0_35 = arith.constant 0 : index
    %31 = vector.load %arg4[%c0_34, %c0_35] : memref<4x1xf32, #tpu.memory_space<vmem>>, vector<4x1xf32>
    %32 = vector.broadcast %31 : vector<4x1xf32> to vector<4x288xf32>
    %33 = arith.addf %30, %32 : vector<4x288xf32>
    %cst_36 = arith.constant 0.000000e+00 : f32
    %34 = vector.broadcast %cst_36 : f32 to vector<4x288xf32>
    %35 = arith.cmpf ogt, %33, %34 : vector<4x288xf32>
    %36 = vector.broadcast %0 : f32 to vector<4x288xf32>
    %37 = arith.mulf %36, %33 : vector<4x288xf32>
    %38 = arith.select %35, %33, %37 : vector<4x288xi1>, vector<4x288xf32>
    %c0_37 = arith.constant 0 : index
    %c0_38 = arith.constant 0 : index
    %39 = vector.load %arg5[%c0_37, %c0_38] : memref<4x1xf32, #tpu.memory_space<vmem>>, vector<4x1xf32>
    %40 = vector.broadcast %39 : vector<4x1xf32> to vector<4x288xf32>
    %41 = arith.mulf %38, %40 : vector<4x288xf32>
    %c0_39 = arith.constant 0 : index
    %c0_40 = arith.constant 0 : index
    %42 = vector.load %arg6[%c0_39, %c0_40] : memref<4x1xf32, #tpu.memory_space<vmem>>, vector<4x1xf32>
    %43 = vector.broadcast %42 : vector<4x1xf32> to vector<4x288xf32>
    %44 = arith.addf %41, %43 : vector<4x288xf32>
    %c0_41 = arith.constant 0 : index
    %c0_42 = arith.constant 0 : index
    %c0_43 = arith.constant 0 : index
    %45 = vector.load %arg7[%c0_41, %c0_42, %c0_43] : memref<1x4x288xf32, #tpu.memory_space<vmem>>, vector<1x4x288xf32>
    %46 = vector.shape_cast %45 : vector<1x4x288xf32> to vector<4x288xf32>
    %47 = vector.shape_cast %44 : vector<4x288xf32> to vector<1x4x288xf32>
    tpu.vector_store %arg7[%c0_41, %c0_42, %c0_43], %47 {strides = array<i32>} : memref<1x4x288xf32, #tpu.memory_space<vmem>>, vector<1x4x288xf32>,
    return
  }
  func.func @transform_0(%arg0: i32) -> i32 {
    %c0_i32 = arith.constant 0 : i32
    %c0_i32_0 = arith.constant 0 : i32
    return %c0_i32 : i32
  }
  func.func @transform_1(%arg0: i32) -> (i32, i32, i32) {
    %c0_i32 = arith.constant 0 : i32
    %c0_i32_0 = arith.constant 0 : i32
    %c0_i32_1 = arith.constant 0 : i32
    return %arg0, %c0_i32, %c0_i32_0 : i32, i32, i32
  }
  func.func @transform_2(%arg0: i32) -> (i32, i32) {
    %c0_i32 = arith.constant 0 : i32
    %c0_i32_0 = arith.constant 0 : i32
    %c0_i32_1 = arith.constant 0 : i32
    return %c0_i32, %c0_i32_0 : i32, i32
  }
  func.func @transform_3(%arg0: i32) -> (i32, i32) {
    %c0_i32 = arith.constant 0 : i32
    %c0_i32_0 = arith.constant 0 : i32
    %c0_i32_1 = arith.constant 0 : i32
    return %c0_i32, %c0_i32_0 : i32, i32
  }
  func.func @transform_4(%arg0: i32) -> (i32, i32) {
    %c0_i32 = arith.constant 0 : i32
    %c0_i32_0 = arith.constant 0 : i32
    %c0_i32_1 = arith.constant 0 : i32
    return %c0_i32, %c0_i32_0 : i32, i32
  }
  func.func @transform_5(%arg0: i32) -> (i32, i32) {
    %c0_i32 = arith.constant 0 : i32
    %c0_i32_0 = arith.constant 0 : i32
    %c0_i32_1 = arith.constant 0 : i32
    return %c0_i32, %c0_i32_0 : i32, i32
  }
  func.func @transform_6(%arg0: i32) -> (i32, i32, i32) {
    %c0_i32 = arith.constant 0 : i32
    %c0_i32_0 = arith.constant 0 : i32
    %c0_i32_1 = arith.constant 0 : i32
    return %arg0, %c0_i32, %c0_i32_0 : i32, i32, i32
  }
}

</mosaic_0001>

<llo_original>
// kernel: residual_block_forward.2
$region0: #{residual_block_forward.2}
  #allocation0 [shape = 'u32[]', space=smem, size = 0x4, offset = 0x4, fixed_abs, tag = 'smem constant byte address 0x4 - core index']
  #allocation1 [shape = 'u32[144,128]{1,0:T(1,128)}', space=vmem, size = 0x12000, scoped, tag = 'internal scratch']
  #allocation2 [shape = 'bf16[36,288]{1,0:T(8,128)(2,1)}', space=vmem, size = 0x7800, scoped, tag = 'scratch operand']
  #allocation3 [shape = 'f32[1]{0:T(128)S(6)}', space=smem, size = 0x200, scoped, tag = 'scoped memory for residual_block_forward.2']
  %s0 = inlined_call_operand.<no memory space> [shape: f32[1], index: 0, kind: input, shape index: {}]
  %s1 = inlined_call_operand.vmem [shape: bf16[2,4,326], index: 1, kind: input, shape index: {}]
  %s2 = inlined_call_operand.vmem [shape: bf16[4,36], index: 2, kind: input, shape index: {}]
  %s3 = inlined_call_operand.vmem [shape: f32[4,1], index: 3, kind: input, shape index: {}]
  %s4 = inlined_call_operand.vmem [shape: f32[1,288], index: 4, kind: input, shape index: {}]
  %s5 = inlined_call_operand.vmem [shape: f32[2,4,1], index: 5, kind: output, shape index: {0}]
  %s6 = inlined_call_operand.vmem [shape: f32[2,4,1], index: 6, kind: output, shape index: {1}]
  %7 = xla_tuple %s5, %s6
  %s8 = sld [smem:[#allocation0]]
  $region61: #{residual_block_forward.2} parent=0
    _
  %s10 = ssub.s32 1, %s8
  %s11 = scalar_select 0, %s10, %s8
  %12 = sst [smem:[#allocation3]] %s0
  loop: start=0, step=1, limit=4
  $region2: #{residual_block_forward.2} parent=0 // loop_pre_header
    _
  $region3: #{residual_block_forward.2} parent=0 // loop_header
    %s14 = sphi 0, %s18
    %p15 = scmp.ge.s32.totalorder %s14, 4
    %s22 = sphi 0, %s22
    %s24 = sphi 0, %s22
    %s25 = sphi 0, %s24
    %s39 = sphi 0, %s25
    %s45 = sphi 0, %s47
    %s48 = sphi 0, %s45
    %s49 = sphi 0, %s48
    %s65 = sphi 0, %s49
    %s69 = sphi 0, %s69
    %s71 = sphi 0, %s69
    %s72 = sphi 0, %s71
    %s86 = sphi 0, %s72
    %s90 = sphi 0, %s90
    %s92 = sphi 0, %s90
    %s93 = sphi 0, %s92
    %s107 = sphi 0, %s93
    %s111 = sphi 0, %s111
    %s113 = sphi 0, %s111
    %s114 = sphi 0, %s113
    %s128 = sphi 0, %s114
    %s134 = sphi 0, %s136
    %s137 = sphi 0, %s134
    %s138 = sphi 0, %s137
    %s154 = sphi 0, %s138
    %s160 = sphi 0, %s162
    %s163 = sphi 0, %s160
    %s164 = sphi 0, %s163
    %s180 = sphi 0, %s164
  $region4: #{residual_block_forward.2} parent=0 // loop_header_branch
    %17 = sbr.rel (%p15) target = $region8
  $region5: #{residual_block_forward.2} parent=0 // loop_body
    %s19 = ssub.s32 %s14, 1
    %s20 = ssub.s32 %s14, 2
    %s21 = sadd.s32 %s14, 1
    %s23 = sadd.s32 %s22, 1
    %p26 = scmp.eq.s32.totalorder %s14, 1
    %p27 = scmp.ne.s32.totalorder %s22, %s24
    %p28 = scmp.eq.s32.totalorder %s14, 0
    %p29 = por %p27, %p28
    %p30 = scmp.ne.s32.totalorder %s22, %s24
    %p31 = scmp.eq.s32.totalorder %s19, 1
    %p32 = por %p30, %p31
    %p33 = scmp.ne.s32.totalorder %s24, %s25
    %p34 = scmp.eq.s32.totalorder %s19, 0
    %p35 = por %p33, %p34
    %p36 = scmp.ne.s32.totalorder %s24, %s25
    %p37 = scmp.eq.s32.totalorder %s20, 1
    %p38 = por %p36, %p37
    %p40 = scmp.ne.s32.totalorder %s25, %s39
    %p41 = scmp.eq.s32.totalorder %s20, 0
    %p42 = por %p40, %p41
    %s43 = ssub.s32 %s14, %s21
    %p44 = scmp.eq.s32.totalorder %s43, 0
    %s46 = sadd.s32 %s45, 1
    %s47 = scalar_select %p44, %s45, %s46
    %p50 = pneg %p44
    %p51 = scmp.eq.s32.totalorder %s14, 1
    %p52 = por %p50, %p51
    %p53 = scmp.ne.s32.totalorder %s45, %s48
    %p54 = scmp.eq.s32.totalorder %s14, 0
    %p55 = por %p53, %p54
    %p56 = scmp.ne.s32.totalorder %s45, %s48
    %p57 = scmp.eq.s32.totalorder %s19, 1
    %p58 = por %p56, %p57
    %p59 = scmp.ne.s32.totalorder %s48, %s49
    %p60 = scmp.eq.s32.totalorder %s19, 0
    %p61 = por %p59, %p60
    %p62 = scmp.ne.s32.totalorder %s48, %s49
    %p63 = scmp.eq.s32.totalorder %s20, 1
    %p64 = por %p62, %p63
    %p66 = scmp.ne.s32.totalorder %s49, %s65
    %p67 = scmp.eq.s32.totalorder %s20, 0
    %p68 = por %p66, %p67
    %s70 = sadd.s32 %s69, 1
    %p73 = scmp.eq.s32.totalorder %s14, 1
    %p74 = scmp.ne.s32.totalorder %s69, %s71
    %p75 = scmp.eq.s32.totalorder %s14, 0
    %p76 = por %p74, %p75
    %p77 = scmp.ne.s32.totalorder %s69, %s71
    %p78 = scmp.eq.s32.totalorder %s19, 1
    %p79 = por %p77, %p78
    %p80 = scmp.ne.s32.totalorder %s71, %s72
    %p81 = scmp.eq.s32.totalorder %s19, 0
    %p82 = por %p80, %p81
    %p83 = scmp.ne.s32.totalorder %s71, %s72
    %p84 = scmp.eq.s32.totalorder %s20, 1
    %p85 = por %p83, %p84
    %p87 = scmp.ne.s32.totalorder %s72, %s86
    %p88 = scmp.eq.s32.totalorder %s20, 0
    %p89 = por %p87, %p88
    %s91 = sadd.s32 %s90, 1
    %p94 = scmp.eq.s32.totalorder %s14, 1
    %p95 = scmp.ne.s32.totalorder %s90, %s92
    %p96 = scmp.eq.s32.totalorder %s14, 0
    %p97 = por %p95, %p96
    %p98 = scmp.ne.s32.totalorder %s90, %s92
    %p99 = scmp.eq.s32.totalorder %s19, 1
    %p100 = por %p98, %p99
    %p101 = scmp.ne.s32.totalorder %s92, %s93
    %p102 = scmp.eq.s32.totalorder %s19, 0
    %p103 = por %p101, %p102
    %p104 = scmp.ne.s32.totalorder %s92, %s93
    %p105 = scmp.eq.s32.totalorder %s20, 1
    %p106 = por %p104, %p105
    %p108 = scmp.ne.s32.totalorder %s93, %s107
    %p109 = scmp.eq.s32.totalorder %s20, 0
    %p110 = por %p108, %p109
    %s112 = sadd.s32 %s111, 1
    %p115 = scmp.eq.s32.totalorder %s14, 1
    %p116 = scmp.ne.s32.totalorder %s111, %s113
    %p117 = scmp.eq.s32.totalorder %s14, 0
    %p118 = por %p116, %p117
    %p119 = scmp.ne.s32.totalorder %s111, %s113
    %p120 = scmp.eq.s32.totalorder %s19, 1
    %p121 = por %p119, %p120
    %p122 = scmp.ne.s32.totalorder %s113, %s114
    %p123 = scmp.eq.s32.totalorder %s19, 0
    %p124 = por %p122, %p123
    %p125 = scmp.ne.s32.totalorder %s113, %s114
    %p126 = scmp.eq.s32.totalorder %s20, 1
    %p127 = por %p125, %p126
    %p129 = scmp.ne.s32.totalorder %s114, %s128
    %p130 = scmp.eq.s32.totalorder %s20, 0
    %p131 = por %p129, %p130
    %s132 = ssub.s32 %s14, %s21
    %p133 = scmp.eq.s32.totalorder %s132, 0
    %s135 = sadd.s32 %s134, 1
    %s136 = scalar_select %p133, %s134, %s135
    %p139 = pneg %p133
    %p140 = scmp.eq.s32.totalorder %s14, 1
    %p141 = por %p139, %p140
    %p142 = scmp.ne.s32.totalorder %s134, %s137
    %p143 = scmp.eq.s32.totalorder %s14, 0
    %p144 = por %p142, %p143
    %p145 = scmp.ne.s32.totalorder %s134, %s137
    %p146 = scmp.eq.s32.totalorder %s19, 1
    %p147 = por %p145, %p146
    %p148 = scmp.ne.s32.totalorder %s137, %s138
    %p149 = scmp.eq.s32.totalorder %s19, 0
    %p150 = por %p148, %p149
    %p151 = scmp.ne.s32.totalorder %s137, %s138
    %p152 = scmp.eq.s32.totalorder %s20, 1
    %p153 = por %p151, %p152
    %p155 = scmp.ne.s32.totalorder %s138, %s154
    %p156 = scmp.eq.s32.totalorder %s20, 0
    %p157 = por %p155, %p156
    %s158 = ssub.s32 %s14, %s21
    %p159 = scmp.eq.s32.totalorder %s158, 0
    %s161 = sadd.s32 %s160, 1
    %s162 = scalar_select %p159, %s160, %s161
    %p165 = pneg %p159
    %p166 = scmp.eq.s32.totalorder %s14, 1
    %p167 = por %p165, %p166
    %p168 = scmp.ne.s32.totalorder %s160, %s163
    %p169 = scmp.eq.s32.totalorder %s14, 0
    %p170 = por %p168, %p169
    %p171 = scmp.ne.s32.totalorder %s160, %s163
    %p172 = scmp.eq.s32.totalorder %s19, 1
    %p173 = por %p171, %p172
    %p174 = scmp.ne.s32.totalorder %s163, %s164
    %p175 = scmp.eq.s32.totalorder %s19, 0
    %p176 = por %p174, %p175
    %p177 = scmp.ne.s32.totalorder %s163, %s164
    %p178 = scmp.eq.s32.totalorder %s20, 1
    %p179 = por %p177, %p178
    %p181 = scmp.ne.s32.totalorder %s164, %s180
    %p182 = scmp.eq.s32.totalorder %s20, 0
    %p183 = por %p181, %p182
    %p184 = scmp.le.s32.totalorder 1, %s14
    %p185 = scmp.lt.s32.totalorder %s14, 3
    %p186 = pnand %p184, %p185
    %p187 = pneg %p186
    // Predicated region
    $region9: #{residual_block_forward.2} parent=5 // pred_check
      _
    $region10: #{residual_block_forward.2} parent=5 // pred_check_branch
      %189 = sbr.rel (%p186) target = $region12
    $region11: #{residual_block_forward.2} parent=5 // pred_region
      %s190 = ssub.s32 %s14, 1
      // Predicated region
      $region13: #{residual_block_forward.2} parent=11 // pred_check
        %p191 = pneg %p35
      $region14: #{residual_block_forward.2} parent=11 // pred_check_branch
        %193 = sbr.rel (%p191) target = $region16
      $region15: #{residual_block_forward.2} parent=11 // pred_region
        _
      $region16: #{residual_block_forward.2} parent=11 // pred_fallthru
        _
      // Predicated region
      $region17: #{residual_block_forward.2} parent=11 // pred_check
        %p194 = pneg %p82
      $region18: #{residual_block_forward.2} parent=11 // pred_check_branch
        %196 = sbr.rel (%p194) target = $region20
      $region19: #{residual_block_forward.2} parent=11 // pred_region
        _
      $region20: #{residual_block_forward.2} parent=11 // pred_fallthru
        _
      // Predicated region
      $region21: #{residual_block_forward.2} parent=11 // pred_check
        %p197 = pneg %p103
      $region22: #{residual_block_forward.2} parent=11 // pred_check_branch
        %199 = sbr.rel (%p197) target = $region24
      $region23: #{residual_block_forward.2} parent=11 // pred_region
        _
      $region24: #{residual_block_forward.2} parent=11 // pred_fallthru
        _
      // Predicated region
      $region25: #{residual_block_forward.2} parent=11 // pred_check
        %p200 = pneg %p124
      $region26: #{residual_block_forward.2} parent=11 // pred_check_branch
        %202 = sbr.rel (%p200) target = $region28
      $region27: #{residual_block_forward.2} parent=11 // pred_region
        _
      $region28: #{residual_block_forward.2} parent=11 // pred_fallthru
        _
    $region12: #{residual_block_forward.2} parent=5 // pred_fallthru
      _
    %p203 = scmp.lt.s32.totalorder %s14, 2
    // Predicated region
    $region29: #{residual_block_forward.2} parent=5 // pred_check
      %p204 = pneg %p203
    $region30: #{residual_block_forward.2} parent=5 // pred_check_branch
      %206 = sbr.rel (%p204) target = $region32
    $region31: #{residual_block_forward.2} parent=5 // pred_region
      // Predicated region
      $region33: #{residual_block_forward.2} parent=31 // pred_check
        %p207 = pneg %p55
      $region34: #{residual_block_forward.2} parent=31 // pred_check_branch
        %209 = sbr.rel (%p207) target = $region36
      $region35: #{residual_block_forward.2} parent=31 // pred_region
        %p210 = scmp.lt.s32.totalorder %s14, 1
        %s211 = scalar_select %p210, %s14, 1
        %s212 = smul.addr %s211, 3
        %s213 = smul.addr %s212, 2
        %s214 = scalar_lea.vmem %s1, %s213
      $region36: #{residual_block_forward.2} parent=31 // pred_fallthru
        _
    $region32: #{residual_block_forward.2} parent=5 // pred_fallthru
      _
    %p215 = scmp.le.s32.totalorder 1, %s14
    %p216 = scmp.lt.s32.totalorder %s14, 3
    %p217 = pnand %p215, %p216
    %p218 = pneg %p217
    // Predicated region
    $region37: #{residual_block_forward.2} parent=5 // pred_check
      _
    $region38: #{residual_block_forward.2} parent=5 // pred_check_branch
      %220 = sbr.rel (%p217) target = $region40
    $region39: #{residual_block_forward.2} parent=5 // pred_region
      %s221 = ssub.s32 %s14, 1
      %p222 = pneg %p35
      %p223 = pneg %p32
      %p224 = scmp.lt.s32.totalorder %s19, 1
      %s225 = scalar_select %p224, %s19, 1
      %s226 = smul.addr %s225, 3
      %s227 = smul.addr %s226, 2
      %s228 = scalar_lea.vmem %s1, %s227
      %p229 = pneg %p61
      %p230 = pneg %p58
      %p231 = pneg %p82
      %p232 = pneg %p79
      %p233 = pneg %p103
      %p234 = pneg %p100
      %p235 = pneg %p124
      %p236 = pneg %p121
      %p237 = pneg %p150
      %p238 = pneg %p147
      %p239 = scmp.lt.s32.totalorder %s19, 1
      %s240 = scalar_select %p239, %s19, 1
      %s241 = smul.addr %s240, 4
      %s242 = scalar_lea.vmem %s5, %s241
      %p243 = pneg %p176
      %p244 = pneg %p173
      %p245 = scmp.lt.s32.totalorder %s19, 1
      %s246 = scalar_select %p245, %s19, 1
      %s247 = smul.addr %s246, 4
      %s248 = scalar_lea.vmem %s6, %s247
      %p249 = scmp.lt.s32.totalorder %s19, 1
      %s250 = scalar_select %p249, %s19, 1
      %s251 = smul.addr %s250, 3
      %s252 = smul.addr %s251, 2
      %s253 = scalar_lea.vmem %s1, %s252
      %p254 = scmp.lt.s32.totalorder %s19, 1
      %s255 = scalar_select %p254, %s19, 1
      %s256 = smul.addr %s255, 4
      %s257 = scalar_lea.vmem %s5, %s256
      %p258 = scmp.lt.s32.totalorder %s19, 1
      %s259 = scalar_select %p258, %s19, 1
      %s260 = smul.addr %s259, 4
      %s261 = scalar_lea.vmem %s6, %s260
      %s263 = sld [smem:[#allocation3]]
      %v264 = vld [vmem:[%s253] sm:$0x3f]
      %v266 = vcombine.high %v264, %v264
      %v268 = vunpack.c.l.s4 1983009808
      %v269 = vunpack.c.0.s8 %v268
      %v270 = vlaneseq
      %v271 = vshrl.u32 %v270, 7
      %v272 = vsub.s32 %v269, %v271
      %v273 = vrot.slane %v264, %v272
      %v275 = vunpack.c.l.s4 1983009808
      %v276 = vunpack.c.0.s8 %v275
      %v277 = vlaneseq
      %v278 = vshrl.u32 %v277, 7
      %v279 = vsub.s32 %v276, %v278
      %v280 = vrot.slane %v266, %v279
      %283 = vst [vmem:[#allocation2] sm:$0x33] %v273
      %vm284 = vcmask 254976
      %285 = vst.msk [vmem:[#allocation2 + $0x8] sm:$0x3] %vm284, %v280
      %v286 = vld [vmem:[%s253] sm:$0x3f]
      %v288 = vcombine.low %v286, %v286
      %v290 = vunpack.c.l.s4 1983009808
      %v291 = vunpack.c.0.s8 %v290
      %v292 = vlaneseq
      %v293 = vshrl.u32 %v292, 7
      %v294 = vsub.s32 %v291, %v293
      %v295 = vrot.slane %v288, %v294
      %v297 = vunpack.c.l.s4 1983009808
      %v298 = vunpack.c.0.s8 %v297
      %v299 = vlaneseq
      %v300 = vshrl.u32 %v299, 7
      %v301 = vsub.s32 %v298, %v300
      %v302 = vrot.slane %v286, %v301
      %303 = vrot.lane.b32.xlu0 %v295, 127
      %v304 = vpop.permute.xlu0 %303
      %305 = vrot.lane.b32.xlu0 %v302, 127
      %v306 = vpop.permute.xlu0 %305
      %v307 = vrot.slane %v304, 4
      %v308 = vrot.slane %v306, 4
      %vm309 = vcmask 1043456
      %v310 = vsel %vm309, %v307, %v308
      %vm311 = vcmask 1039360
      %v312 = vsel %vm311, %v304, %v310
      %315 = vst [vmem:[#allocation2] sm:$0xcc] %v312
      %vm316 = vcmask 257026
      %317 = vst.msk [vmem:[#allocation2 + $0x8] sm:$0xc] %vm316, %v306
      %v318 = vld [vmem:[%s253] sm:$0x3f]
      %v320 = vcombine.high %v318, %v318
      %v322 = vunpack.c.l.s4 1983009808
      %v323 = vunpack.c.0.s8 %v322
      %v324 = vlaneseq
      %v325 = vshrl.u32 %v324, 7
      %v326 = vsub.s32 %v323, %v325
      %v327 = vrot.slane %v318, %v326
      %v329 = vunpack.c.l.s4 1983009808
      %v330 = vunpack.c.0.s8 %v329
      %v331 = vlaneseq
      %v332 = vshrl.u32 %v331, 7
      %v333 = vsub.s32 %v330, %v332
      %v334 = vrot.slane %v320, %v333
      %335 = vrot.lane.b32.xlu0 %v327, 126
      %v336 = vpop.permute.xlu0 %335
      %337 = vrot.lane.b32.xlu0 %v334, 126
      %v338 = vpop.permute.xlu0 %337
      %v339 = vrot.slane %v336, 4
      %v340 = vrot.slane %v338, 4
      %v341 = vsel %vm309, %v339, %v340
      %vm342 = vcmask 1031168
      %v343 = vsel %vm342, %v336, %v341
      %346 = vst [vmem:[#allocation2 + $0xc] sm:$0x33] %v343
      %347 = vst.msk [vmem:[#allocation2 + $0x14] sm:$0x3] %vm284, %v338
      %v348 = vld [vmem:[%s253] sm:$0x3f]
      %v350 = vcombine.low %v348, %v348
      %v352 = vunpack.c.l.s4 1983009808
      %v353 = vunpack.c.0.s8 %v352
      %v354 = vlaneseq
      %v355 = vshrl.u32 %v354, 7
      %v356 = vsub.s32 %v353, %v355
      %v357 = vrot.slane %v350, %v356
      %v359 = vunpack.c.l.s4 1983009808
      %v360 = vunpack.c.0.s8 %v359
      %v361 = vlaneseq
      %v362 = vshrl.u32 %v361, 7
      %v363 = vsub.s32 %v360, %v362
      %v364 = vrot.slane %v348, %v363
      %365 = vrot.lane.b32.xlu0 %v357, 110
      %v366 = vpop.permute.xlu0 %365
      %367 = vrot.lane.b32.xlu0 %v364, 110
      %v368 = vpop.permute.xlu0 %367
      %v369 = vrot.slane %v366, 4
      %v370 = vrot.slane %v368, 4
      %v371 = vsel %vm309, %v369, %v370
      %vm372 = vcmask 900096
      %v373 = vsel %vm372, %v366, %v371
      %376 = vst [vmem:[#allocation2 + $0xc] sm:$0xcc] %v373
      %377 = vst.msk [vmem:[#allocation2 + $0x14] sm:$0xc] %vm316, %v368
      %v378 = vld [vmem:[%s253] sm:$0x3f]
      %v380 = vcombine.high %v378, %v378
      %v382 = vunpack.c.l.s4 1983009808
      %v383 = vunpack.c.0.s8 %v382
      %v384 = vlaneseq
      %v385 = vshrl.u32 %v384, 7
      %v386 = vsub.s32 %v383, %v385
      %v387 = vrot.slane %v378, %v386
      %v389 = vunpack.c.l.s4 1983009808
      %v390 = vunpack.c.0.s8 %v389
      %v391 = vlaneseq
      %v392 = vshrl.u32 %v391, 7
      %v393 = vsub.s32 %v390, %v392
      %v394 = vrot.slane %v380, %v393
      %395 = vrot.lane.b32.xlu0 %v387, 109
      %v396 = vpop.permute.xlu0 %395
      %397 = vrot.lane.b32.xlu0 %v394, 109
      %v398 = vpop.permute.xlu0 %397
      %v399 = vrot.slane %v396, 4
      %v400 = vrot.slane %v398, 4
      %v401 = vsel %vm309, %v399, %v400
      %vm402 = vcmask 891904
      %v403 = vsel %vm402, %v396, %v401
      %406 = vst [vmem:[#allocation2 + $0x18] sm:$0x33] %v403
      %407 = vst.msk [vmem:[#allocation2 + $0x20] sm:$0x3] %vm284, %v398
      %v408 = vld [vmem:[%s253] sm:$0x3f]
      %v410 = vcombine.low %v408, %v408
      %v412 = vunpack.c.l.s4 1983009808
      %v413 = vunpack.c.0.s8 %v412
      %v414 = vlaneseq
      %v415 = vshrl.u32 %v414, 7
      %v416 = vsub.s32 %v413, %v415
      %v417 = vrot.slane %v410, %v416
      %v419 = vunpack.c.l.s4 1983009808
      %v420 = vunpack.c.0.s8 %v419
      %v421 = vlaneseq
      %v422 = vshrl.u32 %v421, 7
      %v423 = vsub.s32 %v420, %v422
      %v424 = vrot.slane %v408, %v423
      %425 = vrot.lane.b32.xlu0 %v417, 108
      %v426 = vpop.permute.xlu0 %425
      %427 = vrot.lane.b32.xlu0 %v424, 108
      %v428 = vpop.permute.xlu0 %427
      %v429 = vrot.slane %v426, 4
      %v430 = vrot.slane %v428, 4
      %v431 = vsel %vm309, %v429, %v430
      %vm432 = vcmask 883712
      %v433 = vsel %vm432, %v426, %v431
      %436 = vst [vmem:[#allocation2 + $0x18] sm:$0xcc] %v433
      %437 = vst.msk [vmem:[#allocation2 + $0x20] sm:$0xc] %vm316, %v428
      %v438 = vld [vmem:[%s253] sm:$0x3f]
      %v440 = vcombine.high %v438, %v438
      %v442 = vunpack.c.l.s4 1983009808
      %v443 = vunpack.c.0.s8 %v442
      %v444 = vlaneseq
      %v445 = vshrl.u32 %v444, 7
      %v446 = vsub.s32 %v443, %v445
      %v447 = vrot.slane %v438, %v446
      %v449 = vunpack.c.l.s4 1983009808
      %v450 = vunpack.c.0.s8 %v449
      %v451 = vlaneseq
      %v452 = vshrl.u32 %v451, 7
      %v453 = vsub.s32 %v450, %v452
      %v454 = vrot.slane %v440, %v453
      %455 = vrot.lane.b32.xlu0 %v447, 92
      %v456 = vpop.permute.xlu0 %455
      %457 = vrot.lane.b32.xlu0 %v454, 92
      %v458 = vpop.permute.xlu0 %457
      %v459 = vrot.slane %v456, 4
      %v460 = vrot.slane %v458, 4
      %v461 = vsel %vm309, %v459, %v460
      %vm462 = vcmask 752640
      %v463 = vsel %vm462, %v456, %v461
      %466 = vst [vmem:[#allocation2 + $0x24] sm:$0x33] %v463
      %467 = vst.msk [vmem:[#allocation2 + $0x2c] sm:$0x3] %vm284, %v458
      %v468 = vld [vmem:[%s253] sm:$0x3f]
      %v470 = vcombine.low %v468, %v468
      %v472 = vunpack.c.l.s4 1983009808
      %v473 = vunpack.c.0.s8 %v472
      %v474 = vlaneseq
      %v475 = vshrl.u32 %v474, 7
      %v476 = vsub.s32 %v473, %v475
      %v477 = vrot.slane %v470, %v476
      %v479 = vunpack.c.l.s4 1983009808
      %v480 = vunpack.c.0.s8 %v479
      %v481 = vlaneseq
      %v482 = vshrl.u32 %v481, 7
      %v483 = vsub.s32 %v480, %v482
      %v484 = vrot.slane %v468, %v483
      %485 = vrot.lane.b32.xlu0 %v477, 91
      %v486 = vpop.permute.xlu0 %485
      %487 = vrot.lane.b32.xlu0 %v484, 91
      %v488 = vpop.permute.xlu0 %487
      %v489 = vrot.slane %v486, 4
      %v490 = vrot.slane %v488, 4
      %v491 = vsel %vm309, %v489, %v490
      %vm492 = vcmask 744448
      %v493 = vsel %vm492, %v486, %v491
      %496 = vst [vmem:[#allocation2 + $0x24] sm:$0xcc] %v493
      %497 = vst.msk [vmem:[#allocation2 + $0x2c] sm:$0xc] %vm316, %v488
      %v498 = vld [vmem:[%s253] sm:$0x3f]
      %v500 = vcombine.high %v498, %v498
      %v502 = vunpack.c.l.s4 1983009808
      %v503 = vunpack.c.0.s8 %v502
      %v504 = vlaneseq
      %v505 = vshrl.u32 %v504, 7
      %v506 = vsub.s32 %v503, %v505
      %v507 = vrot.slane %v498, %v506
      %v509 = vunpack.c.l.s4 1983009808
      %v510 = vunpack.c.0.s8 %v509
      %v511 = vlaneseq
      %v512 = vshrl.u32 %v511, 7
      %v513 = vsub.s32 %v510, %v512
      %v514 = vrot.slane %v500, %v513
      %515 = vrot.lane.b32.xlu0 %v507, 90
      %v516 = vpop.permute.xlu0 %515
      %517 = vrot.lane.b32.xlu0 %v514, 90
      %v518 = vpop.permute.xlu0 %517
      %v519 = vrot.slane %v516, 4
      %v520 = vrot.slane %v518, 4
      %v521 = vsel %vm309, %v519, %v520
      %vm522 = vcmask 736256
      %v523 = vsel %vm522, %v516, %v521
      %526 = vst [vmem:[#allocation2 + $0x30] sm:$0x33] %v523
      %527 = vst.msk [vmem:[#allocation2 + $0x38] sm:$0x3] %vm284, %v518
      %v528 = vld [vmem:[%s2] sm:$0x3]
      %v529 = vld [vmem:[#allocation2] sm:$0xff]
      %v530 = vld [vmem:[#allocation2 + $0x8] sm:$0xf]
      %v531 = vld [vmem:[#allocation2 + $0xc] sm:$0xff]
      %v532 = vld [vmem:[#allocation2 + $0x14] sm:$0xf]
      %v533 = vld [vmem:[#allocation2 + $0x18] sm:$0xff]
      %v534 = vld [vmem:[#allocation2 + $0x20] sm:$0xf]
      %v535 = vld [vmem:[#allocation2 + $0x24] sm:$0xff]
      %v536 = vld [vmem:[#allocation2 + $0x2c] sm:$0xf]
      %v537 = vld [vmem:[#allocation2 + $0x30] sm:$0x33]
      %v538 = vld [vmem:[#allocation2 + $0x38] sm:$0x3]
      %v539 = vld [vmem:[%s3] sm:$0xf]
      %541 = vset.pattern.permute.xlu0 0
      %542 = vperm.xlu0 %541, %v539
      %v543 = vpop.permute.xlu0 %542
      %v555 = vunpack.c.l.b16 %v529
      %v556 = vunpack.c.h.b16 %v529
      %v557 = vunpack.c.l.b16 %v530
      %v558 = vunpack.c.l.b16 %v531
      %v559 = vunpack.c.h.b16 %v531
      %v560 = vunpack.c.l.b16 %v532
      %v561 = vunpack.c.l.b16 %v533
      %v562 = vunpack.c.h.b16 %v533
      %v563 = vunpack.c.l.b16 %v534
      %v564 = vunpack.c.l.b16 %v535
      %v565 = vunpack.c.h.b16 %v535
      %v566 = vunpack.c.l.b16 %v536
      %v567 = vunpack.c.l.b16 %v537
      %v568 = vunpack.c.h.b16 %v537
      %v569 = vunpack.c.l.b16 %v538
      %v570 = vpack.c.b16 %v558, %v555
      %v571 = vpack.c.b16 %v559, %v556
      %v572 = vpack.c.b16 %v560, %v557
      %v573 = vpack.c.b16 %v564, %v561
      %v574 = vpack.c.b16 %v565, %v562
      %v575 = vpack.c.b16 %v566, %v563
      %v576 = vpack.c.b16 %v567, %v567
      %v577 = vpack.c.b16 %v568, %v568
      %v578 = vpack.c.b16 %v569, %v569
      %vm585 = vcmask 293888
      %v587 = vsel %vm585, %v528, 0
      %vm589 = vcmask 1041408
      %v591 = vsel %vm589, %v576, 0
      %v594 = vsel %vm589, %v577, 0
      %v597 = vsel %vm589, %v578, 0
      %599 = vmatprep.subr.bf16.mxu0 %v571
      %600 = vmatpush1.bf16.msra.mxu0 %v570
      %601 = vmatprep.subr.bf16.mxu0 %v574
      %602 = vmatpush1.bf16.msra.mxu0 %v573
      %603 = vmatprep.subr.bf16.mxu0 %v594
      %604 = vmatpush1.bf16.msra.mxu0 %v591
      %605 = vmatprep.subr.bf16.mxu0 0
      %606 = vmatpush1.bf16.msra.mxu0 0
      %607 = vmatprep.subr.bf16.mxu0 0
      %608 = vmatpush1.bf16.msra.mxu0 0
      %609 = vmatprep.subr.bf16.mxu0 0
      %610 = vmatpush1.bf16.msra.mxu0 0
      %611 = vmatprep.subr.bf16.mxu0 0
      %612 = vmatpush1.bf16.msra.mxu0 0
      %613 = vmatprep.subr.bf16.mxu0 0
      %614 = vmatpush1.bf16.msra.mxu0 0
      %615 = vmatprep.subr.bf16.mxu0 0
      %616 = vmatpush1.bf16.msra.mxu0 0
      %617 = vmatprep.subr.bf16.mxu0 0
      %618 = vmatpush1.bf16.msra.mxu0 0
      %619 = vmatprep.subr.bf16.mxu0 0
      %620 = vmatpush1.bf16.msra.mxu0 0
      %621 = vmatprep.subr.bf16.mxu0 0
      %622 = vmatpush1.bf16.msra.mxu0 0
      %623 = vmatprep.subr.bf16.mxu0 0
      %624 = vmatpush1.bf16.msra.mxu0 0
      %625 = vmatprep.subr.bf16.mxu0 0
      %626 = vmatpush1.bf16.msra.mxu0 0
      %627 = vmatprep.subr.bf16.mxu0 0
      %628 = vmatpush1.bf16.msra.mxu0 0
      %629 = vmatprep.subr.bf16.mxu0 0
      %630 = vmatpush1.bf16.msra.mxu0 0
      %631 = vmatprep.mubr.bf16.mxu0 0
      %632 = vmatmul.mubr.bf16.gmra.mrb[0].mxu0 %v587
      %v633 = vpop.f32.mrb[0].mxu0
      %v634 = vadd.f32 %v543, %v633
      %v635 = vpop.f32.mrb[0].mxu0
      %v636 = vadd.f32 %v543, %v635
      %v637 = vpop.f32.mrb[0].mxu0
      %v638 = vpop.f32.mrb[0].mxu0
      %639 = vdwg.mxu0
      %640 = vmatprep.subr.bf16.mxu0 0
      %641 = vmatpush1.bf16.msra.mxu0 %v572
      %642 = vmatprep.subr.bf16.mxu0 0
      %643 = vmatpush1.bf16.msra.mxu0 %v575
      %644 = vmatprep.subr.bf16.mxu0 0
      %645 = vmatpush1.bf16.msra.mxu0 %v597
      %646 = vmatprep.subr.bf16.mxu0 0
      %647 = vmatpush1.bf16.msra.mxu0 0
      %648 = vmatprep.subr.bf16.mxu0 0
      %649 = vmatpush1.bf16.msra.mxu0 0
      %650 = vmatprep.subr.bf16.mxu0 0
      %651 = vmatpush1.bf16.msra.mxu0 0
      %652 = vmatprep.subr.bf16.mxu0 0
      %653 = vmatpush1.bf16.msra.mxu0 0
      %654 = vmatprep.subr.bf16.mxu0 0
      %655 = vmatpush1.bf16.msra.mxu0 0
      %656 = vmatprep.subr.bf16.mxu0 0
      %657 = vmatpush1.bf16.msra.mxu0 0
      %658 = vmatprep.subr.bf16.mxu0 0
      %659 = vmatpush1.bf16.msra.mxu0 0
      %660 = vmatprep.subr.bf16.mxu0 0
      %661 = vmatpush1.bf16.msra.mxu0 0
      %662 = vmatprep.subr.bf16.mxu0 0
      %663 = vmatpush1.bf16.msra.mxu0 0
      %664 = vmatprep.subr.bf16.mxu0 0
      %665 = vmatpush1.bf16.msra.mxu0 0
      %666 = vmatprep.subr.bf16.mxu0 0
      %667 = vmatpush1.bf16.msra.mxu0 0
      %668 = vmatprep.subr.bf16.mxu0 0
      %669 = vmatpush1.bf16.msra.mxu0 0
      %670 = vmatprep.subr.bf16.mxu0 0
      %671 = vmatpush1.bf16.msra.mxu0 0
      %672 = vmatprep.mubr.bf16.mxu0 0
      %673 = vmatmul.mubr.bf16.gmra.mrb[0].mxu0 %v587
      %v674 = vpop.f32.mrb[0].mxu0
      %v675 = vadd.f32 %v543, %v674
      %v676 = vpop.f32.mrb[0].mxu0
      %v677 = vpop.f32.mrb[0].mxu0
      %v678 = vpop.f32.mrb[0].mxu0
      %679 = vdwg.mxu0
      %vm680 = vcmp.gt.f32.partialorder %v634, 0.0
      %vm681 = vcmp.gt.f32.partialorder %v636, 0.0
      %vm682 = vcmp.gt.f32.partialorder %v675, 0.0
      %v683 = vstv %s263
      %v684 = vmul.f32 %v683, %v634
      %v685 = vmul.f32 %v683, %v636
      %v686 = vmul.f32 %v683, %v675
      %v687 = vsel %vm680, %v634, %v684
      %v688 = vsel %vm681, %v636, %v685
      %v689 = vsel %vm682, %v675, %v686
      %v690 = vld [vmem:[%s4] sm:$0x7]
      %v692 = vlaneseq
      %v693 = vshrl.u32 %v692, 7
      %v694 = vsub.s32 0, %v693
      %v695 = vrot.slane %v690, %v694
      %v696 = vlaneseq
      %v697 = vshrl.u32 %v696, 7
      %v698 = vsub.s32 1, %v697
      %v699 = vrot.slane %v690, %v698
      %v700 = vlaneseq
      %v701 = vshrl.u32 %v700, 7
      %v702 = vsub.s32 2, %v701
      %v703 = vrot.slane %v690, %v702
      %v707 = vmul.f32 %v687, %v695
      %v708 = vmul.f32 %v688, %v699
      %v709 = vmul.f32 %v689, %v703
      %vm710 = vcmask 1043456
      %v711 = vsel %vm710, %v707, 0.0
      %v712 = vsel %vm710, %v708, 0.0
      %v713 = vadd.f32 %v711, %v712
      %vm714 = vcmask 257024
      %v715 = vsel %vm714, %v709, 0.0
      %v716 = vadd.f32 %v713, %v715
      %717 = vadd.xlane.f32.xlu0 %v716
      %v718 = vpop.xlane.xlu0 %717
      %v719 = vmul.f32 %v718, 0.00390625
      %v720 = vsub.f32 %v687, %v719
      %v721 = vsub.f32 %v688, %v719
      %v722 = vsub.f32 %v689, %v719
      %v723 = vmul.f32 %v720, %v695
      %v724 = vmul.f32 %v721, %v699
      %v725 = vmul.f32 %v722, %v703
      %v726 = vmul.f32 %v723, %v723
      %v727 = vmul.f32 %v724, %v724
      %v728 = vmul.f32 %v725, %v725
      %v729 = vsel %vm710, %v726, 0.0
      %v730 = vsel %vm710, %v727, 0.0
      %v731 = vadd.f32 %v729, %v730
      %v732 = vsel %vm714, %v728, 0.0
      %v733 = vadd.f32 %v731, %v732
      %734 = vadd.xlane.f32.xlu0 %v733
      %v735 = vpop.xlane.xlu0 %734
      %vm736 = vcmask 3072
      %737 = vst.msk [vmem:[%s257] sm:$0xf] %vm736, %v718
      %738 = vst.msk [vmem:[%s261] sm:$0xf] %vm736, %v735
      %p739 = scmp.lt.s32.totalorder %s19, 1
      %s740 = scalar_select %p739, %s19, 1
      %s741 = smul.addr %s740, 4
      %s742 = scalar_lea.vmem %s5, %s741
      %p743 = scmp.lt.s32.totalorder %s19, 1
      %s744 = scalar_select %p743, %s19, 1
      %s745 = smul.addr %s744, 4
      %s746 = scalar_lea.vmem %s6, %s745
      // Predicated region
      $region41: #{residual_block_forward.2} parent=39 // pred_check
        %p747 = pneg %p147
      $region42: #{residual_block_forward.2} parent=39 // pred_check_branch
        %749 = sbr.rel (%p747) target = $region44
      $region43: #{residual_block_forward.2} parent=39 // pred_region
        _
      $region44: #{residual_block_forward.2} parent=39 // pred_fallthru
        _
      // Predicated region
      $region45: #{residual_block_forward.2} parent=39 // pred_check
        %p750 = pneg %p173
      $region46: #{residual_block_forward.2} parent=39 // pred_check_branch
        %752 = sbr.rel (%p750) target = $region48
      $region47: #{residual_block_forward.2} parent=39 // pred_region
        _
      $region48: #{residual_block_forward.2} parent=39 // pred_fallthru
        _
    $region40: #{residual_block_forward.2} parent=5 // pred_fallthru
      _
    %p753 = scmp.le.s32.totalorder 2, %s14
    // Predicated region
    $region49: #{residual_block_forward.2} parent=5 // pred_check
      %p754 = pneg %p753
    $region50: #{residual_block_forward.2} parent=5 // pred_check_branch
      %756 = sbr.rel (%p754) target = $region52
    $region51: #{residual_block_forward.2} parent=5 // pred_region
      %s757 = ssub.s32 %s14, 2
      // Predicated region
      $region53: #{residual_block_forward.2} parent=51 // pred_check
        %p758 = pneg %p153
      $region54: #{residual_block_forward.2} parent=51 // pred_check_branch
        %760 = sbr.rel (%p758) target = $region56
      $region55: #{residual_block_forward.2} parent=51 // pred_region
        %p761 = scmp.lt.s32.totalorder %s20, 1
        %s762 = scalar_select %p761, %s20, 1
        %s763 = smul.addr %s762, 4
        %s764 = scalar_lea.vmem %s5, %s763
      $region56: #{residual_block_forward.2} parent=51 // pred_fallthru
        _
      // Predicated region
      $region57: #{residual_block_forward.2} parent=51 // pred_check
        %p765 = pneg %p179
      $region58: #{residual_block_forward.2} parent=51 // pred_check_branch
        %767 = sbr.rel (%p765) target = $region60
      $region59: #{residual_block_forward.2} parent=51 // pred_region
        %p768 = scmp.lt.s32.totalorder %s20, 1
        %s769 = scalar_select %p768, %s20, 1
        %s770 = smul.addr %s769, 4
        %s771 = scalar_lea.vmem %s6, %s770
      $region60: #{residual_block_forward.2} parent=51 // pred_fallthru
        _
    $region52: #{residual_block_forward.2} parent=5 // pred_fallthru
      _
  $region6: #{residual_block_forward.2} parent=0 // loop_footer
    %s18 = sadd.s32 1, %s14
  $region7: #{residual_block_forward.2} parent=0 // loop_footer_branch
    %13 = sbr.rel target = $region3
  $region8: #{residual_block_forward.2} parent=0 // loop_exit
    _

// kernel: residual_block_forward.3
$region0: #{residual_block_forward.3}
  #allocation0 [shape = 'u32[]', space=smem, size = 0x4, offset = 0x4, fixed_abs, tag = 'smem constant byte address 0x4 - core index']
  #allocation1 [shape = 'u32[144,128]{1,0:T(1,128)}', space=vmem, size = 0x12000, scoped, tag = 'internal scratch']
  #allocation2 [shape = 'bf16[36,288]{1,0:T(8,128)(2,1)}', space=vmem, size = 0x7800, scoped, tag = 'scratch operand']
  #allocation3 [shape = 'f32[1]{0:T(128)S(6)}', space=smem, size = 0x200, scoped, tag = 'scoped memory for residual_block_forward.3']
  %s0 = inlined_call_operand.<no memory space> [shape: f32[1], index: 0, kind: input, shape index: {}]
  %s1 = inlined_call_operand.vmem [shape: bf16[2,4,326], index: 1, kind: input, shape index: {}]
  %s2 = inlined_call_operand.vmem [shape: bf16[4,36], index: 2, kind: input, shape index: {}]
  %s3 = inlined_call_operand.vmem [shape: f32[4,1], index: 3, kind: input, shape index: {}]
  %s4 = inlined_call_operand.vmem [shape: f32[4,1], index: 4, kind: input, shape index: {}]
  %s5 = inlined_call_operand.vmem [shape: f32[4,1], index: 5, kind: input, shape index: {}]
  %s6 = inlined_call_operand.vmem [shape: f32[2,4,288], index: 6, kind: output, shape index: {}]
  %s7 = sld [smem:[#allocation0]]
  $region57: #{residual_block_forward.3} parent=0
    _
  %s9 = ssub.s32 1, %s7
  %s10 = scalar_select 0, %s9, %s7
  %11 = sst [smem:[#allocation3]] %s0
  loop: start=0, step=1, limit=4
  $region2: #{residual_block_forward.3} parent=0 // loop_pre_header
    _
  $region3: #{residual_block_forward.3} parent=0 // loop_header
    %s13 = sphi 0, %s17
    %p14 = scmp.ge.s32.totalorder %s13, 4
    %s21 = sphi 0, %s21
    %s23 = sphi 0, %s21
    %s24 = sphi 0, %s23
    %s38 = sphi 0, %s24
    %s44 = sphi 0, %s46
    %s47 = sphi 0, %s44
    %s48 = sphi 0, %s47
    %s64 = sphi 0, %s48
    %s68 = sphi 0, %s68
    %s70 = sphi 0, %s68
    %s71 = sphi 0, %s70
    %s85 = sphi 0, %s71
    %s89 = sphi 0, %s89
    %s91 = sphi 0, %s89
    %s92 = sphi 0, %s91
    %s106 = sphi 0, %s92
    %s110 = sphi 0, %s110
    %s112 = sphi 0, %s110
    %s113 = sphi 0, %s112
    %s127 = sphi 0, %s113
    %s131 = sphi 0, %s131
    %s133 = sphi 0, %s131
    %s134 = sphi 0, %s133
    %s148 = sphi 0, %s134
    %s154 = sphi 0, %s156
    %s157 = sphi 0, %s154
    %s158 = sphi 0, %s157
    %s174 = sphi 0, %s158
  $region4: #{residual_block_forward.3} parent=0 // loop_header_branch
    %16 = sbr.rel (%p14) target = $region8
  $region5: #{residual_block_forward.3} parent=0 // loop_body
    %s18 = ssub.s32 %s13, 1
    %s19 = ssub.s32 %s13, 2
    %s20 = sadd.s32 %s13, 1
    %s22 = sadd.s32 %s21, 1
    %p25 = scmp.eq.s32.totalorder %s13, 1
    %p26 = scmp.ne.s32.totalorder %s21, %s23
    %p27 = scmp.eq.s32.totalorder %s13, 0
    %p28 = por %p26, %p27
    %p29 = scmp.ne.s32.totalorder %s21, %s23
    %p30 = scmp.eq.s32.totalorder %s18, 1
    %p31 = por %p29, %p30
    %p32 = scmp.ne.s32.totalorder %s23, %s24
    %p33 = scmp.eq.s32.totalorder %s18, 0
    %p34 = por %p32, %p33
    %p35 = scmp.ne.s32.totalorder %s23, %s24
    %p36 = scmp.eq.s32.totalorder %s19, 1
    %p37 = por %p35, %p36
    %p39 = scmp.ne.s32.totalorder %s24, %s38
    %p40 = scmp.eq.s32.totalorder %s19, 0
    %p41 = por %p39, %p40
    %s42 = ssub.s32 %s13, %s20
    %p43 = scmp.eq.s32.totalorder %s42, 0
    %s45 = sadd.s32 %s44, 1
    %s46 = scalar_select %p43, %s44, %s45
    %p49 = pneg %p43
    %p50 = scmp.eq.s32.totalorder %s13, 1
    %p51 = por %p49, %p50
    %p52 = scmp.ne.s32.totalorder %s44, %s47
    %p53 = scmp.eq.s32.totalorder %s13, 0
    %p54 = por %p52, %p53
    %p55 = scmp.ne.s32.totalorder %s44, %s47
    %p56 = scmp.eq.s32.totalorder %s18, 1
    %p57 = por %p55, %p56
    %p58 = scmp.ne.s32.totalorder %s47, %s48
    %p59 = scmp.eq.s32.totalorder %s18, 0
    %p60 = por %p58, %p59
    %p61 = scmp.ne.s32.totalorder %s47, %s48
    %p62 = scmp.eq.s32.totalorder %s19, 1
    %p63 = por %p61, %p62
    %p65 = scmp.ne.s32.totalorder %s48, %s64
    %p66 = scmp.eq.s32.totalorder %s19, 0
    %p67 = por %p65, %p66
    %s69 = sadd.s32 %s68, 1
    %p72 = scmp.eq.s32.totalorder %s13, 1
    %p73 = scmp.ne.s32.totalorder %s68, %s70
    %p74 = scmp.eq.s32.totalorder %s13, 0
    %p75 = por %p73, %p74
    %p76 = scmp.ne.s32.totalorder %s68, %s70
    %p77 = scmp.eq.s32.totalorder %s18, 1
    %p78 = por %p76, %p77
    %p79 = scmp.ne.s32.totalorder %s70, %s71
    %p80 = scmp.eq.s32.totalorder %s18, 0
    %p81 = por %p79, %p80
    %p82 = scmp.ne.s32.totalorder %s70, %s71
    %p83 = scmp.eq.s32.totalorder %s19, 1
    %p84 = por %p82, %p83
    %p86 = scmp.ne.s32.totalorder %s71, %s85
    %p87 = scmp.eq.s32.totalorder %s19, 0
    %p88 = por %p86, %p87
    %s90 = sadd.s32 %s89, 1
    %p93 = scmp.eq.s32.totalorder %s13, 1
    %p94 = scmp.ne.s32.totalorder %s89, %s91
    %p95 = scmp.eq.s32.totalorder %s13, 0
    %p96 = por %p94, %p95
    %p97 = scmp.ne.s32.totalorder %s89, %s91
    %p98 = scmp.eq.s32.totalorder %s18, 1
    %p99 = por %p97, %p98
    %p100 = scmp.ne.s32.totalorder %s91, %s92
    %p101 = scmp.eq.s32.totalorder %s18, 0
    %p102 = por %p100, %p101
    %p103 = scmp.ne.s32.totalorder %s91, %s92
    %p104 = scmp.eq.s32.totalorder %s19, 1
    %p105 = por %p103, %p104
    %p107 = scmp.ne.s32.totalorder %s92, %s106
    %p108 = scmp.eq.s32.totalorder %s19, 0
    %p109 = por %p107, %p108
    %s111 = sadd.s32 %s110, 1
    %p114 = scmp.eq.s32.totalorder %s13, 1
    %p115 = scmp.ne.s32.totalorder %s110, %s112
    %p116 = scmp.eq.s32.totalorder %s13, 0
    %p117 = por %p115, %p116
    %p118 = scmp.ne.s32.totalorder %s110, %s112
    %p119 = scmp.eq.s32.totalorder %s18, 1
    %p120 = por %p118, %p119
    %p121 = scmp.ne.s32.totalorder %s112, %s113
    %p122 = scmp.eq.s32.totalorder %s18, 0
    %p123 = por %p121, %p122
    %p124 = scmp.ne.s32.totalorder %s112, %s113
    %p125 = scmp.eq.s32.totalorder %s19, 1
    %p126 = por %p124, %p125
    %p128 = scmp.ne.s32.totalorder %s113, %s127
    %p129 = scmp.eq.s32.totalorder %s19, 0
    %p130 = por %p128, %p129
    %s132 = sadd.s32 %s131, 1
    %p135 = scmp.eq.s32.totalorder %s13, 1
    %p136 = scmp.ne.s32.totalorder %s131, %s133
    %p137 = scmp.eq.s32.totalorder %s13, 0
    %p138 = por %p136, %p137
    %p139 = scmp.ne.s32.totalorder %s131, %s133
    %p140 = scmp.eq.s32.totalorder %s18, 1
    %p141 = por %p139, %p140
    %p142 = scmp.ne.s32.totalorder %s133, %s134
    %p143 = scmp.eq.s32.totalorder %s18, 0
    %p144 = por %p142, %p143
    %p145 = scmp.ne.s32.totalorder %s133, %s134
    %p146 = scmp.eq.s32.totalorder %s19, 1
    %p147 = por %p145, %p146
    %p149 = scmp.ne.s32.totalorder %s134, %s148
    %p150 = scmp.eq.s32.totalorder %s19, 0
    %p151 = por %p149, %p150
    %s152 = ssub.s32 %s13, %s20
    %p153 = scmp.eq.s32.totalorder %s152, 0
    %s155 = sadd.s32 %s154, 1
    %s156 = scalar_select %p153, %s154, %s155
    %p159 = pneg %p153
    %p160 = scmp.eq.s32.totalorder %s13, 1
    %p161 = por %p159, %p160
    %p162 = scmp.ne.s32.totalorder %s154, %s157
    %p163 = scmp.eq.s32.totalorder %s13, 0
    %p164 = por %p162, %p163
    %p165 = scmp.ne.s32.totalorder %s154, %s157
    %p166 = scmp.eq.s32.totalorder %s18, 1
    %p167 = por %p165, %p166
    %p168 = scmp.ne.s32.totalorder %s157, %s158
    %p169 = scmp.eq.s32.totalorder %s18, 0
    %p170 = por %p168, %p169
    %p171 = scmp.ne.s32.totalorder %s157, %s158
    %p172 = scmp.eq.s32.totalorder %s19, 1
    %p173 = por %p171, %p172
    %p175 = scmp.ne.s32.totalorder %s158, %s174
    %p176 = scmp.eq.s32.totalorder %s19, 0
    %p177 = por %p175, %p176
    %p178 = scmp.le.s32.totalorder 1, %s13
    %p179 = scmp.lt.s32.totalorder %s13, 3
    %p180 = pnand %p178, %p179
    %p181 = pneg %p180
    // Predicated region
    $region9: #{residual_block_forward.3} parent=5 // pred_check
      _
    $region10: #{residual_block_forward.3} parent=5 // pred_check_branch
      %183 = sbr.rel (%p180) target = $region12
    $region11: #{residual_block_forward.3} parent=5 // pred_region
      %s184 = ssub.s32 %s13, 1
      // Predicated region
      $region13: #{residual_block_forward.3} parent=11 // pred_check
        %p185 = pneg %p34
      $region14: #{residual_block_forward.3} parent=11 // pred_check_branch
        %187 = sbr.rel (%p185) target = $region16
      $region15: #{residual_block_forward.3} parent=11 // pred_region
        _
      $region16: #{residual_block_forward.3} parent=11 // pred_fallthru
        _
      // Predicated region
      $region17: #{residual_block_forward.3} parent=11 // pred_check
        %p188 = pneg %p81
      $region18: #{residual_block_forward.3} parent=11 // pred_check_branch
        %190 = sbr.rel (%p188) target = $region20
      $region19: #{residual_block_forward.3} parent=11 // pred_region
        _
      $region20: #{residual_block_forward.3} parent=11 // pred_fallthru
        _
      // Predicated region
      $region21: #{residual_block_forward.3} parent=11 // pred_check
        %p191 = pneg %p102
      $region22: #{residual_block_forward.3} parent=11 // pred_check_branch
        %193 = sbr.rel (%p191) target = $region24
      $region23: #{residual_block_forward.3} parent=11 // pred_region
        _
      $region24: #{residual_block_forward.3} parent=11 // pred_fallthru
        _
      // Predicated region
      $region25: #{residual_block_forward.3} parent=11 // pred_check
        %p194 = pneg %p123
      $region26: #{residual_block_forward.3} parent=11 // pred_check_branch
        %196 = sbr.rel (%p194) target = $region28
      $region27: #{residual_block_forward.3} parent=11 // pred_region
        _
      $region28: #{residual_block_forward.3} parent=11 // pred_fallthru
        _
      // Predicated region
      $region29: #{residual_block_forward.3} parent=11 // pred_check
        %p197 = pneg %p144
      $region30: #{residual_block_forward.3} parent=11 // pred_check_branch
        %199 = sbr.rel (%p197) target = $region32
      $region31: #{residual_block_forward.3} parent=11 // pred_region
        _
      $region32: #{residual_block_forward.3} parent=11 // pred_fallthru
        _
    $region12: #{residual_block_forward.3} parent=5 // pred_fallthru
      _
    %p200 = scmp.lt.s32.totalorder %s13, 2
    // Predicated region
    $region33: #{residual_block_forward.3} parent=5 // pred_check
      %p201 = pneg %p200
    $region34: #{residual_block_forward.3} parent=5 // pred_check_branch
      %203 = sbr.rel (%p201) target = $region36
    $region35: #{residual_block_forward.3} parent=5 // pred_region
      // Predicated region
      $region37: #{residual_block_forward.3} parent=35 // pred_check
        %p204 = pneg %p54
      $region38: #{residual_block_forward.3} parent=35 // pred_check_branch
        %206 = sbr.rel (%p204) target = $region40
      $region39: #{residual_block_forward.3} parent=35 // pred_region
        %p207 = scmp.lt.s32.totalorder %s13, 1
        %s208 = scalar_select %p207, %s13, 1
        %s209 = smul.addr %s208, 3
        %s210 = smul.addr %s209, 2
        %s211 = scalar_lea.vmem %s1, %s210
      $region40: #{residual_block_forward.3} parent=35 // pred_fallthru
        _
    $region36: #{residual_block_forward.3} parent=5 // pred_fallthru
      _
    %p212 = scmp.le.s32.totalorder 1, %s13
    %p213 = scmp.lt.s32.totalorder %s13, 3
    %p214 = pnand %p212, %p213
    %p215 = pneg %p214
    // Predicated region
    $region41: #{residual_block_forward.3} parent=5 // pred_check
      _
    $region42: #{residual_block_forward.3} parent=5 // pred_check_branch
      %217 = sbr.rel (%p214) target = $region44
    $region43: #{residual_block_forward.3} parent=5 // pred_region
      %s218 = ssub.s32 %s13, 1
      %p219 = pneg %p34
      %p220 = pneg %p31
      %p221 = scmp.lt.s32.totalorder %s18, 1
      %s222 = scalar_select %p221, %s18, 1
      %s223 = smul.addr %s222, 3
      %s224 = smul.addr %s223, 2
      %s225 = scalar_lea.vmem %s1, %s224
      %p226 = pneg %p60
      %p227 = pneg %p57
      %p228 = pneg %p81
      %p229 = pneg %p78
      %p230 = pneg %p102
      %p231 = pneg %p99
      %p232 = pneg %p123
      %p233 = pneg %p120
      %p234 = pneg %p144
      %p235 = pneg %p141
      %p236 = pneg %p170
      %p237 = pneg %p167
      %p238 = scmp.lt.s32.totalorder %s18, 1
      %s239 = scalar_select %p238, %s18, 1
      %s240 = smul.addr %s239, 3
      %s241 = smul.addr %s240, 4
      %s242 = scalar_lea.vmem %s6, %s241
      %p243 = scmp.lt.s32.totalorder %s18, 1
      %s244 = scalar_select %p243, %s18, 1
      %s245 = smul.addr %s244, 3
      %s246 = smul.addr %s245, 2
      %s247 = scalar_lea.vmem %s1, %s246
      %p248 = scmp.lt.s32.totalorder %s18, 1
      %s249 = scalar_select %p248, %s18, 1
      %s250 = smul.addr %s249, 3
      %s251 = smul.addr %s250, 4
      %s252 = scalar_lea.vmem %s6, %s251
      %s254 = sld [smem:[#allocation3]]
      %v255 = vld [vmem:[%s247] sm:$0x3f]
      %v257 = vcombine.high %v255, %v255
      %v259 = vunpack.c.l.s4 1983009808
      %v260 = vunpack.c.0.s8 %v259
      %v261 = vlaneseq
      %v262 = vshrl.u32 %v261, 7
      %v263 = vsub.s32 %v260, %v262
      %v264 = vrot.slane %v255, %v263
      %v266 = vunpack.c.l.s4 1983009808
      %v267 = vunpack.c.0.s8 %v266
      %v268 = vlaneseq
      %v269 = vshrl.u32 %v268, 7
      %v270 = vsub.s32 %v267, %v269
      %v271 = vrot.slane %v257, %v270
      %274 = vst [vmem:[#allocation2] sm:$0x33] %v264
      %vm275 = vcmask 254976
      %276 = vst.msk [vmem:[#allocation2 + $0x8] sm:$0x3] %vm275, %v271
      %v277 = vld [vmem:[%s247] sm:$0x3f]
      %v279 = vcombine.low %v277, %v277
      %v281 = vunpack.c.l.s4 1983009808
      %v282 = vunpack.c.0.s8 %v281
      %v283 = vlaneseq
      %v284 = vshrl.u32 %v283, 7
      %v285 = vsub.s32 %v282, %v284
      %v286 = vrot.slane %v279, %v285
      %v288 = vunpack.c.l.s4 1983009808
      %v289 = vunpack.c.0.s8 %v288
      %v290 = vlaneseq
      %v291 = vshrl.u32 %v290, 7
      %v292 = vsub.s32 %v289, %v291
      %v293 = vrot.slane %v277, %v292
      %294 = vrot.lane.b32.xlu0 %v286, 127
      %v295 = vpop.permute.xlu0 %294
      %296 = vrot.lane.b32.xlu0 %v293, 127
      %v297 = vpop.permute.xlu0 %296
      %v298 = vrot.slane %v295, 4
      %v299 = vrot.slane %v297, 4
      %vm300 = vcmask 1043456
      %v301 = vsel %vm300, %v298, %v299
      %vm302 = vcmask 1039360
      %v303 = vsel %vm302, %v295, %v301
      %306 = vst [vmem:[#allocation2] sm:$0xcc] %v303
      %vm307 = vcmask 257026
      %308 = vst.msk [vmem:[#allocation2 + $0x8] sm:$0xc] %vm307, %v297
      %v309 = vld [vmem:[%s247] sm:$0x3f]
      %v311 = vcombine.high %v309, %v309
      %v313 = vunpack.c.l.s4 1983009808
      %v314 = vunpack.c.0.s8 %v313
      %v315 = vlaneseq
      %v316 = vshrl.u32 %v315, 7
      %v317 = vsub.s32 %v314, %v316
      %v318 = vrot.slane %v309, %v317
      %v320 = vunpack.c.l.s4 1983009808
      %v321 = vunpack.c.0.s8 %v320
      %v322 = vlaneseq
      %v323 = vshrl.u32 %v322, 7
      %v324 = vsub.s32 %v321, %v323
      %v325 = vrot.slane %v311, %v324
      %326 = vrot.lane.b32.xlu0 %v318, 126
      %v327 = vpop.permute.xlu0 %326
      %328 = vrot.lane.b32.xlu0 %v325, 126
      %v329 = vpop.permute.xlu0 %328
      %v330 = vrot.slane %v327, 4
      %v331 = vrot.slane %v329, 4
      %v332 = vsel %vm300, %v330, %v331
      %vm333 = vcmask 1031168
      %v334 = vsel %vm333, %v327, %v332
      %337 = vst [vmem:[#allocation2 + $0xc] sm:$0x33] %v334
      %338 = vst.msk [vmem:[#allocation2 + $0x14] sm:$0x3] %vm275, %v329
      %v339 = vld [vmem:[%s247] sm:$0x3f]
      %v341 = vcombine.low %v339, %v339
      %v343 = vunpack.c.l.s4 1983009808
      %v344 = vunpack.c.0.s8 %v343
      %v345 = vlaneseq
      %v346 = vshrl.u32 %v345, 7
      %v347 = vsub.s32 %v344, %v346
      %v348 = vrot.slane %v341, %v347
      %v350 = vunpack.c.l.s4 1983009808
      %v351 = vunpack.c.0.s8 %v350
      %v352 = vlaneseq
      %v353 = vshrl.u32 %v352, 7
      %v354 = vsub.s32 %v351, %v353
      %v355 = vrot.slane %v339, %v354
      %356 = vrot.lane.b32.xlu0 %v348, 110
      %v357 = vpop.permute.xlu0 %356
      %358 = vrot.lane.b32.xlu0 %v355, 110
      %v359 = vpop.permute.xlu0 %358
      %v360 = vrot.slane %v357, 4
      %v361 = vrot.slane %v359, 4
      %v362 = vsel %vm300, %v360, %v361
      %vm363 = vcmask 900096
      %v364 = vsel %vm363, %v357, %v362
      %367 = vst [vmem:[#allocation2 + $0xc] sm:$0xcc] %v364
      %368 = vst.msk [vmem:[#allocation2 + $0x14] sm:$0xc] %vm307, %v359
      %v369 = vld [vmem:[%s247] sm:$0x3f]
      %v371 = vcombine.high %v369, %v369
      %v373 = vunpack.c.l.s4 1983009808
      %v374 = vunpack.c.0.s8 %v373
      %v375 = vlaneseq
      %v376 = vshrl.u32 %v375, 7
      %v377 = vsub.s32 %v374, %v376
      %v378 = vrot.slane %v369, %v377
      %v380 = vunpack.c.l.s4 1983009808
      %v381 = vunpack.c.0.s8 %v380
      %v382 = vlaneseq
      %v383 = vshrl.u32 %v382, 7
      %v384 = vsub.s32 %v381, %v383
      %v385 = vrot.slane %v371, %v384
      %386 = vrot.lane.b32.xlu0 %v378, 109
      %v387 = vpop.permute.xlu0 %386
      %388 = vrot.lane.b32.xlu0 %v385, 109
      %v389 = vpop.permute.xlu0 %388
      %v390 = vrot.slane %v387, 4
      %v391 = vrot.slane %v389, 4
      %v392 = vsel %vm300, %v390, %v391
      %vm393 = vcmask 891904
      %v394 = vsel %vm393, %v387, %v392
      %397 = vst [vmem:[#allocation2 + $0x18] sm:$0x33] %v394
      %398 = vst.msk [vmem:[#allocation2 + $0x20] sm:$0x3] %vm275, %v389
      %v399 = vld [vmem:[%s247] sm:$0x3f]
      %v401 = vcombine.low %v399, %v399
      %v403 = vunpack.c.l.s4 1983009808
      %v404 = vunpack.c.0.s8 %v403
      %v405 = vlaneseq
      %v406 = vshrl.u32 %v405, 7
      %v407 = vsub.s32 %v404, %v406
      %v408 = vrot.slane %v401, %v407
      %v410 = vunpack.c.l.s4 1983009808
      %v411 = vunpack.c.0.s8 %v410
      %v412 = vlaneseq
      %v413 = vshrl.u32 %v412, 7
      %v414 = vsub.s32 %v411, %v413
      %v415 = vrot.slane %v399, %v414
      %416 = vrot.lane.b32.xlu0 %v408, 108
      %v417 = vpop.permute.xlu0 %416
      %418 = vrot.lane.b32.xlu0 %v415, 108
      %v419 = vpop.permute.xlu0 %418
      %v420 = vrot.slane %v417, 4
      %v421 = vrot.slane %v419, 4
      %v422 = vsel %vm300, %v420, %v421
      %vm423 = vcmask 883712
      %v424 = vsel %vm423, %v417, %v422
      %427 = vst [vmem:[#allocation2 + $0x18] sm:$0xcc] %v424
      %428 = vst.msk [vmem:[#allocation2 + $0x20] sm:$0xc] %vm307, %v419
      %v429 = vld [vmem:[%s247] sm:$0x3f]
      %v431 = vcombine.high %v429, %v429
      %v433 = vunpack.c.l.s4 1983009808
      %v434 = vunpack.c.0.s8 %v433
      %v435 = vlaneseq
      %v436 = vshrl.u32 %v435, 7
      %v437 = vsub.s32 %v434, %v436
      %v438 = vrot.slane %v429, %v437
      %v440 = vunpack.c.l.s4 1983009808
      %v441 = vunpack.c.0.s8 %v440
      %v442 = vlaneseq
      %v443 = vshrl.u32 %v442, 7
      %v444 = vsub.s32 %v441, %v443
      %v445 = vrot.slane %v431, %v444
      %446 = vrot.lane.b32.xlu0 %v438, 92
      %v447 = vpop.permute.xlu0 %446
      %448 = vrot.lane.b32.xlu0 %v445, 92
      %v449 = vpop.permute.xlu0 %448
      %v450 = vrot.slane %v447, 4
      %v451 = vrot.slane %v449, 4
      %v452 = vsel %vm300, %v450, %v451
      %vm453 = vcmask 752640
      %v454 = vsel %vm453, %v447, %v452
      %457 = vst [vmem:[#allocation2 + $0x24] sm:$0x33] %v454
      %458 = vst.msk [vmem:[#allocation2 + $0x2c] sm:$0x3] %vm275, %v449
      %v459 = vld [vmem:[%s247] sm:$0x3f]
      %v461 = vcombine.low %v459, %v459
      %v463 = vunpack.c.l.s4 1983009808
      %v464 = vunpack.c.0.s8 %v463
      %v465 = vlaneseq
      %v466 = vshrl.u32 %v465, 7
      %v467 = vsub.s32 %v464, %v466
      %v468 = vrot.slane %v461, %v467
      %v470 = vunpack.c.l.s4 1983009808
      %v471 = vunpack.c.0.s8 %v470
      %v472 = vlaneseq
      %v473 = vshrl.u32 %v472, 7
      %v474 = vsub.s32 %v471, %v473
      %v475 = vrot.slane %v459, %v474
      %476 = vrot.lane.b32.xlu0 %v468, 91
      %v477 = vpop.permute.xlu0 %476
      %478 = vrot.lane.b32.xlu0 %v475, 91
      %v479 = vpop.permute.xlu0 %478
      %v480 = vrot.slane %v477, 4
      %v481 = vrot.slane %v479, 4
      %v482 = vsel %vm300, %v480, %v481
      %vm483 = vcmask 744448
      %v484 = vsel %vm483, %v477, %v482
      %487 = vst [vmem:[#allocation2 + $0x24] sm:$0xcc] %v484
      %488 = vst.msk [vmem:[#allocation2 + $0x2c] sm:$0xc] %vm307, %v479
      %v489 = vld [vmem:[%s247] sm:$0x3f]
      %v491 = vcombine.high %v489, %v489
      %v493 = vunpack.c.l.s4 1983009808
      %v494 = vunpack.c.0.s8 %v493
      %v495 = vlaneseq
      %v496 = vshrl.u32 %v495, 7
      %v497 = vsub.s32 %v494, %v496
      %v498 = vrot.slane %v489, %v497
      %v500 = vunpack.c.l.s4 1983009808
      %v501 = vunpack.c.0.s8 %v500
      %v502 = vlaneseq
      %v503 = vshrl.u32 %v502, 7
      %v504 = vsub.s32 %v501, %v503
      %v505 = vrot.slane %v491, %v504
      %506 = vrot.lane.b32.xlu0 %v498, 90
      %v507 = vpop.permute.xlu0 %506
      %508 = vrot.lane.b32.xlu0 %v505, 90
      %v509 = vpop.permute.xlu0 %508
      %v510 = vrot.slane %v507, 4
      %v511 = vrot.slane %v509, 4
      %v512 = vsel %vm300, %v510, %v511
      %vm513 = vcmask 736256
      %v514 = vsel %vm513, %v507, %v512
      %517 = vst [vmem:[#allocation2 + $0x30] sm:$0x33] %v514
      %518 = vst.msk [vmem:[#allocation2 + $0x38] sm:$0x3] %vm275, %v509
      %v519 = vld [vmem:[%s2] sm:$0x3]
      %v520 = vld [vmem:[#allocation2] sm:$0xff]
      %v521 = vld [vmem:[#allocation2 + $0x8] sm:$0xf]
      %v522 = vld [vmem:[#allocation2 + $0xc] sm:$0xff]
      %v523 = vld [vmem:[#allocation2 + $0x14] sm:$0xf]
      %v524 = vld [vmem:[#allocation2 + $0x18] sm:$0xff]
      %v525 = vld [vmem:[#allocation2 + $0x20] sm:$0xf]
      %v526 = vld [vmem:[#allocation2 + $0x24] sm:$0xff]
      %v527 = vld [vmem:[#allocation2 + $0x2c] sm:$0xf]
      %v528 = vld [vmem:[#allocation2 + $0x30] sm:$0x33]
      %v529 = vld [vmem:[#allocation2 + $0x38] sm:$0x3]
      %v530 = vld [vmem:[%s3] sm:$0xf]
      %532 = vset.pattern.permute.xlu0 0
      %533 = vperm.xlu0 %532, %v530
      %v534 = vpop.permute.xlu0 %533
      %v546 = vunpack.c.l.b16 %v520
      %v547 = vunpack.c.h.b16 %v520
      %v548 = vunpack.c.l.b16 %v521
      %v549 = vunpack.c.l.b16 %v522
      %v550 = vunpack.c.h.b16 %v522
      %v551 = vunpack.c.l.b16 %v523
      %v552 = vunpack.c.l.b16 %v524
      %v553 = vunpack.c.h.b16 %v524
      %v554 = vunpack.c.l.b16 %v525
      %v555 = vunpack.c.l.b16 %v526
      %v556 = vunpack.c.h.b16 %v526
      %v557 = vunpack.c.l.b16 %v527
      %v558 = vunpack.c.l.b16 %v528
      %v559 = vunpack.c.h.b16 %v528
      %v560 = vunpack.c.l.b16 %v529
      %v561 = vpack.c.b16 %v549, %v546
      %v562 = vpack.c.b16 %v550, %v547
      %v563 = vpack.c.b16 %v551, %v548
      %v564 = vpack.c.b16 %v555, %v552
      %v565 = vpack.c.b16 %v556, %v553
      %v566 = vpack.c.b16 %v557, %v554
      %v567 = vpack.c.b16 %v558, %v558
      %v568 = vpack.c.b16 %v559, %v559
      %v569 = vpack.c.b16 %v560, %v560
      %vm576 = vcmask 293888
      %v578 = vsel %vm576, %v519, 0
      %vm580 = vcmask 1041408
      %v582 = vsel %vm580, %v567, 0
      %v585 = vsel %vm580, %v568, 0
      %v588 = vsel %vm580, %v569, 0
      %590 = vmatprep.subr.bf16.mxu0 %v562
      %591 = vmatpush1.bf16.msra.mxu0 %v561
      %592 = vmatprep.subr.bf16.mxu0 %v565
      %593 = vmatpush1.bf16.msra.mxu0 %v564
      %594 = vmatprep.subr.bf16.mxu0 %v585
      %595 = vmatpush1.bf16.msra.mxu0 %v582
      %596 = vmatprep.subr.bf16.mxu0 0
      %597 = vmatpush1.bf16.msra.mxu0 0
      %598 = vmatprep.subr.bf16.mxu0 0
      %599 = vmatpush1.bf16.msra.mxu0 0
      %600 = vmatprep.subr.bf16.mxu0 0
      %601 = vmatpush1.bf16.msra.mxu0 0
      %602 = vmatprep.subr.bf16.mxu0 0
      %603 = vmatpush1.bf16.msra.mxu0 0
      %604 = vmatprep.subr.bf16.mxu0 0
      %605 = vmatpush1.bf16.msra.mxu0 0
      %606 = vmatprep.subr.bf16.mxu0 0
      %607 = vmatpush1.bf16.msra.mxu0 0
      %608 = vmatprep.subr.bf16.mxu0 0
      %609 = vmatpush1.bf16.msra.mxu0 0
      %610 = vmatprep.subr.bf16.mxu0 0
      %611 = vmatpush1.bf16.msra.mxu0 0
      %612 = vmatprep.subr.bf16.mxu0 0
      %613 = vmatpush1.bf16.msra.mxu0 0
      %614 = vmatprep.subr.bf16.mxu0 0
      %615 = vmatpush1.bf16.msra.mxu0 0
      %616 = vmatprep.subr.bf16.mxu0 0
      %617 = vmatpush1.bf16.msra.mxu0 0
      %618 = vmatprep.subr.bf16.mxu0 0
      %619 = vmatpush1.bf16.msra.mxu0 0
      %620 = vmatprep.subr.bf16.mxu0 0
      %621 = vmatpush1.bf16.msra.mxu0 0
      %622 = vmatprep.mubr.bf16.mxu0 0
      %623 = vmatmul.mubr.bf16.gmra.mrb[0].mxu0 %v578
      %v624 = vpop.f32.mrb[0].mxu0
      %v625 = vadd.f32 %v534, %v624
      %v626 = vpop.f32.mrb[0].mxu0
      %v627 = vadd.f32 %v534, %v626
      %v628 = vpop.f32.mrb[0].mxu0
      %v629 = vpop.f32.mrb[0].mxu0
      %630 = vdwg.mxu0
      %631 = vmatprep.subr.bf16.mxu0 0
      %632 = vmatpush1.bf16.msra.mxu0 %v563
      %633 = vmatprep.subr.bf16.mxu0 0
      %634 = vmatpush1.bf16.msra.mxu0 %v566
      %635 = vmatprep.subr.bf16.mxu0 0
      %636 = vmatpush1.bf16.msra.mxu0 %v588
      %637 = vmatprep.subr.bf16.mxu0 0
      %638 = vmatpush1.bf16.msra.mxu0 0
      %639 = vmatprep.subr.bf16.mxu0 0
      %640 = vmatpush1.bf16.msra.mxu0 0
      %641 = vmatprep.subr.bf16.mxu0 0
      %642 = vmatpush1.bf16.msra.mxu0 0
      %643 = vmatprep.subr.bf16.mxu0 0
      %644 = vmatpush1.bf16.msra.mxu0 0
      %645 = vmatprep.subr.bf16.mxu0 0
      %646 = vmatpush1.bf16.msra.mxu0 0
      %647 = vmatprep.subr.bf16.mxu0 0
      %648 = vmatpush1.bf16.msra.mxu0 0
      %649 = vmatprep.subr.bf16.mxu0 0
      %650 = vmatpush1.bf16.msra.mxu0 0
      %651 = vmatprep.subr.bf16.mxu0 0
      %652 = vmatpush1.bf16.msra.mxu0 0
      %653 = vmatprep.subr.bf16.mxu0 0
      %654 = vmatpush1.bf16.msra.mxu0 0
      %655 = vmatprep.subr.bf16.mxu0 0
      %656 = vmatpush1.bf16.msra.mxu0 0
      %657 = vmatprep.subr.bf16.mxu0 0
      %658 = vmatpush1.bf16.msra.mxu0 0
      %659 = vmatprep.subr.bf16.mxu0 0
      %660 = vmatpush1.bf16.msra.mxu0 0
      %661 = vmatprep.subr.bf16.mxu0 0
      %662 = vmatpush1.bf16.msra.mxu0 0
      %663 = vmatprep.mubr.bf16.mxu0 0
      %664 = vmatmul.mubr.bf16.gmra.mrb[0].mxu0 %v578
      %v665 = vpop.f32.mrb[0].mxu0
      %v666 = vadd.f32 %v534, %v665
      %v667 = vpop.f32.mrb[0].mxu0
      %v668 = vpop.f32.mrb[0].mxu0
      %v669 = vpop.f32.mrb[0].mxu0
      %670 = vdwg.mxu0
      %vm671 = vcmp.gt.f32.partialorder %v625, 0.0
      %vm672 = vcmp.gt.f32.partialorder %v627, 0.0
      %vm673 = vcmp.gt.f32.partialorder %v666, 0.0
      %v674 = vstv %s254
      %v675 = vmul.f32 %v674, %v625
      %v676 = vmul.f32 %v674, %v627
      %v677 = vmul.f32 %v674, %v666
      %v678 = vsel %vm671, %v625, %v675
      %v679 = vsel %vm672, %v627, %v676
      %v680 = vsel %vm673, %v666, %v677
      %v681 = vld [vmem:[%s4] sm:$0xf]
      %683 = vset.pattern.permute.xlu0 0
      %684 = vperm.xlu0 %683, %v681
      %v685 = vpop.permute.xlu0 %684
      %v687 = vmul.f32 %v678, %v685
      %v688 = vmul.f32 %v679, %v685
      %v689 = vmul.f32 %v680, %v685
      %v690 = vld [vmem:[%s5] sm:$0xf]
      %692 = vset.pattern.permute.xlu0 0
      %693 = vperm.xlu0 %692, %v690
      %v694 = vpop.permute.xlu0 %693
      %v696 = vadd.f32 %v687, %v694
      %v697 = vadd.f32 %v688, %v694
      %v698 = vadd.f32 %v689, %v694
      %v701 = vcombine.low %v696, %v697
      %703 = vst [vmem:[%s252] sm:$0xff] %v701
      %vm704 = vcmask 257024
      %705 = vst.msk [vmem:[%s252 + $0x8] sm:$0xf] %vm704, %v698
      %p706 = scmp.lt.s32.totalorder %s18, 1
      %s707 = scalar_select %p706, %s18, 1
      %s708 = smul.addr %s707, 3
      %s709 = smul.addr %s708, 4
      %s710 = scalar_lea.vmem %s6, %s709
      // Predicated region
      $region45: #{residual_block_forward.3} parent=43 // pred_check
        %p711 = pneg %p167
      $region46: #{residual_block_forward.3} parent=43 // pred_check_branch
        %713 = sbr.rel (%p711) target = $region48
      $region47: #{residual_block_forward.3} parent=43 // pred_region
        _
      $region48: #{residual_block_forward.3} parent=43 // pred_fallthru
        _
    $region44: #{residual_block_forward.3} parent=5 // pred_fallthru
      _
    %p714 = scmp.le.s32.totalorder 2, %s13
    // Predicated region
    $region49: #{residual_block_forward.3} parent=5 // pred_check
      %p715 = pneg %p714
    $region50: #{residual_block_forward.3} parent=5 // pred_check_branch
      %717 = sbr.rel (%p715) target = $region52
    $region51: #{residual_block_forward.3} parent=5 // pred_region
      %s718 = ssub.s32 %s13, 2
      // Predicated region
      $region53: #{residual_block_forward.3} parent=51 // pred_check
        %p719 = pneg %p173
      $region54: #{residual_block_forward.3} parent=51 // pred_check_branch
        %721 = sbr.rel (%p719) target = $region56
      $region55: #{residual_block_forward.3} parent=51 // pred_region
        %p722 = scmp.lt.s32.totalorder %s19, 1
        %s723 = scalar_select %p722, %s19, 1
        %s724 = smul.addr %s723, 3
        %s725 = smul.addr %s724, 4
        %s726 = scalar_lea.vmem %s6, %s725
      $region56: #{residual_block_forward.3} parent=51 // pred_fallthru
        _
    $region52: #{residual_block_forward.3} parent=5 // pred_fallthru
      _
  $region6: #{residual_block_forward.3} parent=0 // loop_footer
    %s17 = sadd.s32 1, %s13
  $region7: #{residual_block_forward.3} parent=0 // loop_footer_branch
    %12 = sbr.rel target = $region3
  $region8: #{residual_block_forward.3} parent=0 // loop_exit
    _

</llo_original>
